<compile_context>
chip_gen: v6e
topology: v6e:2x2x1
jax: 0.10.0
libtpu: 0.0.40
codegen_flags: <defaults>
</compile_context>

<pallas_src>
import math

import jax
import jax.numpy as jnp
from jax.experimental import pallas as pl
from jax.experimental.pallas import tpu as pltpu

_LANE = 128  # TPU vreg lane width


def _netd_kernel(x_ref, w1_ref, b1_ref, w2_ref, b2_ref, w3_ref, b3_ref, out_ref):
    # Input / hidden Dropout layers are identity in eval mode.
    x = x_ref[...].astype(jnp.bfloat16)

    # Layer 1: (TB, nhid) @ (nhid, hid); bf16 MXU inputs, f32 accumulation.
    h1 = jnp.dot(x, w1_ref[...], preferred_element_type=jnp.float32)
    h1 = jnp.maximum(h1 + b1_ref[...], 0.0)            # bias + ReLU in f32 (VPU)

    # Layer 2: (TB, hid) @ (hid, hid).
    h2 = jnp.dot(h1.astype(jnp.bfloat16), w2_ref[...],
                 preferred_element_type=jnp.float32)
    h2 = jnp.maximum(h2 + b2_ref[...], 0.0)

    # Layer 3: (TB, hid) @ (hid, 1) -> (TB, 1).  w3 is stored as a column, so
    # this is a plain (M,K)@(K,N) MXU matmul with no transpose of h2.
    out = jnp.dot(h2.astype(jnp.bfloat16), w3_ref[...],
                  preferred_element_type=jnp.float32)
    out_ref[...] = (out + b3_ref[0, 0]).astype(out_ref.dtype)


def _choose_batch_tile(B, cap):
    """Pick (TB, n_tiles) for the batch grid.

    - Large B: TB is a multiple of 128 (satisfies the (8,128) block rule on both
      the (TB, nhid) input and (TB, 1) output blocks), prefers an exact divisor
      of B (no masked tail), and targets >=4 tiles so both v7x TensorCores get
      >=2 tiles each while never exceeding `cap` (VMEM headroom).
    - Small / awkward B: one full-array tile (block == array dims, no padding).
    - Very large ragged B: keep the target tile; Pallas masks the partial tail
      block instead of materializing a padded copy of x.
    """
    cap = max(_LANE, (cap // _LANE) * _LANE)
    if B > 2 * _LANE:
        target = min(cap, max(_LANE, ((B // 4) // _LANE) * _LANE))
        tb = target
        while tb >= _LANE:
            if B % tb == 0:
                return tb, B // tb                 # exact tiling, no masked tail
            tb -= _LANE
        if B > cap:
            return target, pl.cdiv(B, target)      # ragged: masked last tile
    return B, 1                                    # single full-array tile


def netd_forward(x, params, *, block_b=1024):
    """x: (B, nhid) float32 (or bf16) -> (B,) float32 (matches PyTorch .view(-1))."""
    w1, b1, w2, b2, w3, b3 = params
    B, nhid = x.shape
    hid = w1.shape[1]

    TB, n_tiles = _choose_batch_tile(B, block_b)

    # Advisory cost estimate for XLA scheduling around the custom call.
    flops = 2 * B * (nhid * hid + hid * hid + hid)
    bytes_accessed = (
        x.size * x.dtype.itemsize
        + sum(int(p.size) * p.dtype.itemsize for p in params)
        + B * 4)
    cost = pl.CostEstimate(flops=flops, transcendentals=0,
                           bytes_accessed=bytes_accessed)

    out = pl.pallas_call(
        _netd_kernel,
        out_shape=jax.ShapeDtypeStruct((B, 1), jnp.float32),
        grid=(n_tiles,),
        in_specs=[
            # x: one batch tile per grid step (double-buffered by Pallas).
            pl.BlockSpec((TB, nhid), lambda i: (i, 0)),
            # Weights/biases: constant index_map -> DMA'd once, VMEM-resident.
            pl.BlockSpec((nhid, hid), lambda i: (0, 0)),   # w1 (in, out)  bf16
            pl.BlockSpec((1, hid), lambda i: (0, 0)),      # b1            f32
            pl.BlockSpec((hid, hid), lambda i: (0, 0)),    # w2 (in, out)  bf16
            pl.BlockSpec((1, hid), lambda i: (0, 0)),      # b2            f32
            pl.BlockSpec((hid, 1), lambda i: (0, 0)),      # w3 column     bf16
            # b3 scalar in SMEM.
            pl.BlockSpec(memory_space=pltpu.MemorySpace.SMEM),
        ],
        out_specs=pl.BlockSpec((TB, 1), lambda i: (i, 0)),
        compiler_params=pltpu.CompilerParams(
            dimension_semantics=("parallel",),          # megacore sharding on v7x
            vmem_limit_bytes=32 * 1024 * 1024,          # >= v5e default, fits v7x
        ),
        cost_estimate=cost,
    )(x, w1, b1, w2, b2, w3, b3)

    return out.reshape(-1)


def init_netd_params(key, nhid):
    """PyTorch nn.Linear default init (U(-1/sqrt(in), 1/sqrt(in))).
    w1/w2 stored (in, out); w3 stored as a (hid, 1) column; weights bf16
    (explicit quantization choice), biases f32."""
    hid = 2 * nhid
    keys = jax.random.split(key, 6)

    def uinit(k, shape, fan_in, dtype):
        bound = 1.0 / math.sqrt(fan_in)
        return jax.random.uniform(k, shape, jnp.float32, -bound, bound).astype(dtype)

    w1 = uinit(keys[0], (nhid, hid), nhid, jnp.bfloat16)
    b1 = uinit(keys[1], (1, hid), nhid, jnp.float32)
    w2 = uinit(keys[2], (hid, hid), hid, jnp.bfloat16)
    b2 = uinit(keys[3], (1, hid), hid, jnp.float32)
    w3 = uinit(keys[4], (hid, 1), hid, jnp.bfloat16)
    b3 = uinit(keys[5], (1, 1), hid, jnp.float32)
    return (w1, b1, w2, b2, w3, b3)


def netd_reference(x, params):
    """Pure-JAX f32 reference (same bf16-stored weights, f32 math)."""
    w1, b1, w2, b2, w3, b3 = params
    w1, w2, w3 = (w.astype(jnp.float32) for w in (w1, w2, w3))
    h1 = jnp.maximum(x @ w1 + b1, 0.0)
    h2 = jnp.maximum(h1 @ w2 + b2, 0.0)
    return (h2 @ w3 + b3).reshape(-1)


if __name__ == "__main__":
    key = jax.random.PRNGKey(0)
    k_param, k_x = jax.random.split(key)

    nhid = 128                     # -> hid = 2*nhid = 256 (MXU/lane aligned)
    params = init_netd_params(k_param, nhid)

    # Exercise the three tiling paths:
    #   B=1024 : exact multi-tile (TB=256, 4 tiles, megacore-friendly)
    #   B=300  : single full-array tile (no (8,128) alignment needed, no pad)
    #   B=1100 : ragged batch -> Pallas-masked partial last tile (no jnp.pad)
    for B in (1024, 300, 1100):
        kx = jax.random.fold_in(k_x, B)
        x = jax.random.normal(kx, (B, nhid), dtype=jnp.float32)

        out = jax.block_until_ready(netd_forward(x, params))
        ref = netd_reference(x, params)

        assert out.shape == (B,), f"B={B}: bad output shape {out.shape}"
        # bf16 MXU inputs with f32 accumulation -> loosened tolerance vs f32 ref.
        max_err = float(jnp.max(jnp.abs(out - ref)))
        assert jnp.allclose(out, ref, atol=3e-2, rtol=3e-2), (
            f"B={B}: mismatch vs reference, max abs err {max_err}")

    print("KERNEL_OK")
</pallas_src>

<mosaic_0001>
module attributes {stable_mosaic.version = 11 : i64} {
  func.func @_netd_kernel(%arg0: i32, %arg1: memref<256x128xf32, #tpu.memory_space<vmem>>, %arg2: memref<128x256xbf16, #tpu.memory_space<vmem>>, %arg3: memref<1x256xf32, #tpu.memory_space<vmem>>, %arg4: memref<256x256xbf16, #tpu.memory_space<vmem>>, %arg5: memref<1x256xf32, #tpu.memory_space<vmem>>, %arg6: memref<256x1xbf16, #tpu.memory_space<vmem>>, %arg7: memref<1x1xf32, #tpu.memory_space<smem>>, %arg8: memref<256x1xf32, #tpu.memory_space<vmem>>) attributes {dimension_semantics = [#tpu.dimension_semantics<parallel>], iteration_bounds = array<i64: 4>, scalar_prefetch = 0 : i64, scratch_operands = 0 : i64, tpu.core_type = #tpu.core_type<tc>, window_params = [{transform_indices = @transform_0, window_bounds = array<i64: 256, 128>}, {pipeline_mode = #tpu.pipeline_mode<synchronous>, transform_indices = @transform_1, window_bounds = array<i64: 128, 256>}, {pipeline_mode = #tpu.pipeline_mode<synchronous>, transform_indices = @transform_2, window_bounds = array<i64: 1, 256>}, {pipeline_mode = #tpu.pipeline_mode<synchronous>, transform_indices = @transform_3, window_bounds = array<i64: 256, 256>}, {pipeline_mode = #tpu.pipeline_mode<synchronous>, transform_indices = @transform_4, window_bounds = array<i64: 1, 256>}, {pipeline_mode = #tpu.pipeline_mode<synchronous>, transform_indices = @transform_5, window_bounds = array<i64: 256, 1>}, {transform_indices = @transform_6, window_bounds = array<i64: 1, 1>}, {transform_indices = @transform_7, window_bounds = array<i64: 256, 1>}]} {
    %c0 = arith.constant 0 : index
    %c0_0 = arith.constant 0 : index
    %0 = vector.load %arg1[%c0, %c0_0] : memref<256x128xf32, #tpu.memory_space<vmem>>, vector<256x128xf32>
    %1 = arith.truncf %0 : vector<256x128xf32> to vector<256x128xbf16>
    %c0_1 = arith.constant 0 : index
    %c0_2 = arith.constant 0 : index
    %2 = vector.load %arg2[%c0_1, %c0_2] : memref<128x256xbf16, #tpu.memory_space<vmem>>, vector<128x256xbf16>
    %cst = arith.constant dense<0.000000e+00> : vector<256x256xf32>
    %3 = tpu.matmul %1, %2, %cst {dimension_numbers = #tpu.dot_dimension_numbers<[1], [0], [0], [1], [0, 0, 1, 1], [], []>} : vector<256x128xbf16>, vector<128x256xbf16>, vector<256x256xf32> -> vector<256x256xf32>
    %c0_3 = arith.constant 0 : index
    %c0_4 = arith.constant 0 : index
    %4 = vector.load %arg3[%c0_3, %c0_4] : memref<1x256xf32, #tpu.memory_space<vmem>>, vector<1x256xf32>
    %5 = vector.broadcast %4 : vector<1x256xf32> to vector<256x256xf32>
    %6 = arith.addf %3, %5 : vector<256x256xf32>
    %cst_5 = arith.constant 0.000000e+00 : f32
    %7 = vector.broadcast %cst_5 : f32 to vector<256x256xf32>
    %8 = arith.maximumf %6, %7 : vector<256x256xf32>
    %9 = arith.truncf %8 : vector<256x256xf32> to vector<256x256xbf16>
    %c0_6 = arith.constant 0 : index
    %c0_7 = arith.constant 0 : index
    %10 = vector.load %arg4[%c0_6, %c0_7] : memref<256x256xbf16, #tpu.memory_space<vmem>>, vector<256x256xbf16>
    %cst_8 = arith.constant dense<0.000000e+00> : vector<256x256xf32>
    %11 = tpu.matmul %9, %10, %cst_8 {dimension_numbers = #tpu.dot_dimension_numbers<[1], [0], [0], [1], [0, 0, 1, 1], [], []>} : vector<256x256xbf16>, vector<256x256xbf16>, vector<256x256xf32> -> vector<256x256xf32>
    %c0_9 = arith.constant 0 : index
    %c0_10 = arith.constant 0 : index
    %12 = vector.load %arg5[%c0_9, %c0_10] : memref<1x256xf32, #tpu.memory_space<vmem>>, vector<1x256xf32>
    %13 = vector.broadcast %12 : vector<1x256xf32> to vector<256x256xf32>
    %14 = arith.addf %11, %13 : vector<256x256xf32>
    %cst_11 = arith.constant 0.000000e+00 : f32
    %15 = vector.broadcast %cst_11 : f32 to vector<256x256xf32>
    %16 = arith.maximumf %14, %15 : vector<256x256xf32>
    %17 = arith.truncf %16 : vector<256x256xf32> to vector<256x256xbf16>
    %c0_12 = arith.constant 0 : index
    %c0_13 = arith.constant 0 : index
    %18 = vector.load %arg6[%c0_12, %c0_13] : memref<256x1xbf16, #tpu.memory_space<vmem>>, vector<256x1xbf16>
    %cst_14 = arith.constant dense<0.000000e+00> : vector<256x1xf32>
    %19 = tpu.matmul %17, %18, %cst_14 {dimension_numbers = #tpu.dot_dimension_numbers<[1], [0], [0], [1], [0, 0, 1, 1], [], []>} : vector<256x256xbf16>, vector<256x1xbf16>, vector<256x1xf32> -> vector<256x1xf32>
    %c0_15 = arith.constant 0 : index
    %c0_16 = arith.constant 0 : index
    %20 = memref.load %arg7[%c0_15, %c0_16] : memref<1x1xf32, #tpu.memory_space<smem>>
    %21 = vector.broadcast %20 : f32 to vector<256x1xf32>
    %22 = arith.addf %19, %21 : vector<256x1xf32>
    %c0_17 = arith.constant 0 : index
    %c0_18 = arith.constant 0 : index
    %23 = vector.load %arg8[%c0_17, %c0_18] : memref<256x1xf32, #tpu.memory_space<vmem>>, vector<256x1xf32>
    tpu.vector_store %arg8[%c0_17, %c0_18], %22 {strides = array<i32>} : memref<256x1xf32, #tpu.memory_space<vmem>>, vector<256x1xf32>,
    return
  }
  func.func @transform_0(%arg0: i32) -> (i32, i32) {
    %c0_i32 = arith.constant 0 : i32
    %c0_i32_0 = arith.constant 0 : i32
    return %arg0, %c0_i32 : i32, i32
  }
  func.func @transform_1(%arg0: i32) -> (i32, i32) {
    %c0_i32 = arith.constant 0 : i32
    %c0_i32_0 = arith.constant 0 : i32
    %c0_i32_1 = arith.constant 0 : i32
    return %c0_i32, %c0_i32_0 : i32, i32
  }
  func.func @transform_2(%arg0: i32) -> (i32, i32) {
    %c0_i32 = arith.constant 0 : i32
    %c0_i32_0 = arith.constant 0 : i32
    %c0_i32_1 = arith.constant 0 : i32
    return %c0_i32, %c0_i32_0 : i32, i32
  }
  func.func @transform_3(%arg0: i32) -> (i32, i32) {
    %c0_i32 = arith.constant 0 : i32
    %c0_i32_0 = arith.constant 0 : i32
    %c0_i32_1 = arith.constant 0 : i32
    return %c0_i32, %c0_i32_0 : i32, i32
  }
  func.func @transform_4(%arg0: i32) -> (i32, i32) {
    %c0_i32 = arith.constant 0 : i32
    %c0_i32_0 = arith.constant 0 : i32
    %c0_i32_1 = arith.constant 0 : i32
    return %c0_i32, %c0_i32_0 : i32, i32
  }
  func.func @transform_5(%arg0: i32) -> (i32, i32) {
    %c0_i32 = arith.constant 0 : i32
    %c0_i32_0 = arith.constant 0 : i32
    %c0_i32_1 = arith.constant 0 : i32
    return %c0_i32, %c0_i32_0 : i32, i32
  }
  func.func @transform_6(%arg0: i32) -> (i32, i32) {
    %c0_i32 = arith.constant 0 : i32
    %c0_i32_0 = arith.constant 0 : i32
    %c0_i32_1 = arith.constant 0 : i32
    return %c0_i32, %c0_i32_0 : i32, i32
  }
  func.func @transform_7(%arg0: i32) -> (i32, i32) {
    %c0_i32 = arith.constant 0 : i32
    %c0_i32_0 = arith.constant 0 : i32
    return %arg0, %c0_i32 : i32, i32
  }
}

</mosaic_0001>

<llo_original>
// kernel: tpu_custom_call.1
$region0: #{tpu_custom_call.1}
  #allocation0 [shape = 'u32[]', space=smem, size = 0x4, offset = 0x4, fixed_abs, tag = 'smem constant byte address 0x4 - core index']
  #allocation1 [shape = 'u32[144,128]{1,0:T(1,128)}', space=vmem, size = 0x12000, scoped, tag = 'internal scratch']
  #allocation2 [shape = 'f32[1,1]{1,0:T(1,128)S(6)}', space=smem, size = 0x200, scoped, tag = 'scoped memory for tpu_custom_call.1']
  %s0 = inlined_call_operand.hbm [shape: f32[1024,128], index: 0, kind: input, shape index: {}]
  %s1 = inlined_call_operand.vmem [shape: bf16[128,256], index: 1, kind: input, shape index: {}]
  %s2 = inlined_call_operand.vmem [shape: f32[1,256], index: 2, kind: input, shape index: {}]
  %s3 = inlined_call_operand.hbm [shape: bf16[256,256], index: 3, kind: input, shape index: {}]
  %s4 = inlined_call_operand.vmem [shape: f32[1,256], index: 4, kind: input, shape index: {}]
  %s5 = inlined_call_operand.vmem [shape: bf16[256,1], index: 5, kind: input, shape index: {}]
  %s6 = inlined_call_operand.<no memory space> [shape: f32[1,1], index: 6, kind: input, shape index: {}]
  %s7 = inlined_call_operand.vmem [shape: f32[1024,1], index: 7, kind: output, shape index: {}]
  %s8 = sld [smem:[#allocation0]]
  $region69: #{tpu_custom_call.1} parent=0
    _
  %s10 = ssub.s32 1, %s8
  %s11 = scalar_select 0, %s10, %s8
  %12 = sst [smem:[#allocation2]] %s6
  $region1: #{tpu_custom_call.1} parent=0
    #allocation3 [shape = 'u8[262144]{0}', space=vmem, size = 0x40000, scoped, tag = 'input window, operand 0']
    #allocation4 [shape = 's32[2]{0}', space=sflag, size = 0x8, scoped, tag = 'scoped memory for tpu_custom_call.1']
    #allocation5 [shape = 'u8[131072]{0}', space=vmem, size = 0x20000, scoped, tag = 'input window, operand 3, single buffered']
    #allocation6 [shape = 's32[1]{0}', space=sflag, size = 0x4, scoped, tag = 'scoped memory for tpu_custom_call.1']
    %13 = vsyncpa [#allocation4], 0
    %s14 = scalar_lea.sflag [#allocation4], 1
    %15 = vsyncpa %s14, 0
    %16 = vsyncpa [#allocation6], 0
    loop: start=0, step=1, limit=6
    $region2: #{tpu_custom_call.1} parent=1 // loop_pre_header
      _
    $region3: #{tpu_custom_call.1} parent=1 // loop_header
      %s18 = sphi 0, %s22
      %p19 = scmp.ge.s32.totalorder %s18, 6
      %s28 = sphi 0, %s30
      %s31 = sphi 0, %s28
      %s32 = sphi 0, %s31
      %s48 = sphi 0, %s32
      %s52 = sphi 0, %s52
      %s54 = sphi 0, %s52
      %s55 = sphi 0, %s54
      %s69 = sphi 0, %s55
      %s73 = sphi 0, %s73
      %s75 = sphi 0, %s73
      %s76 = sphi 0, %s75
      %s90 = sphi 0, %s76
      %s94 = sphi 0, %s94
      %s96 = sphi 0, %s94
      %s97 = sphi 0, %s96
      %s111 = sphi 0, %s97
      %s115 = sphi 0, %s115
      %s117 = sphi 0, %s115
      %s118 = sphi 0, %s117
      %s132 = sphi 0, %s118
      %s136 = sphi 0, %s136
      %s138 = sphi 0, %s136
      %s139 = sphi 0, %s138
      %s153 = sphi 0, %s139
      %s157 = sphi 0, %s157
      %s159 = sphi 0, %s157
      %s160 = sphi 0, %s159
      %s174 = sphi 0, %s160
      %s180 = sphi 0, %s182
      %s183 = sphi 0, %s180
      %s184 = sphi 0, %s183
      %s200 = sphi 0, %s184
    $region4: #{tpu_custom_call.1} parent=1 // loop_header_branch
      %21 = sbr.rel (%p19) target = $region8
    $region5: #{tpu_custom_call.1} parent=1 // loop_body
      %s23 = ssub.s32 %s18, 1
      %s24 = ssub.s32 %s18, 2
      %s25 = sadd.s32 %s18, 1
      %s26 = ssub.s32 %s18, %s25
      %p27 = scmp.eq.s32.totalorder %s26, 0
      %s29 = sadd.s32 %s28, 1
      %s30 = scalar_select %p27, %s28, %s29
      %p33 = pneg %p27
      %p34 = scmp.eq.s32.totalorder %s18, 3
      %p35 = por %p33, %p34
      %p36 = scmp.ne.s32.totalorder %s28, %s31
      %p37 = scmp.eq.s32.totalorder %s18, 0
      %p38 = por %p36, %p37
      %p39 = scmp.ne.s32.totalorder %s28, %s31
      %p40 = scmp.eq.s32.totalorder %s23, 3
      %p41 = por %p39, %p40
      %p42 = scmp.ne.s32.totalorder %s31, %s32
      %p43 = scmp.eq.s32.totalorder %s23, 0
      %p44 = por %p42, %p43
      %p45 = scmp.ne.s32.totalorder %s31, %s32
      %p46 = scmp.eq.s32.totalorder %s24, 3
      %p47 = por %p45, %p46
      %p49 = scmp.ne.s32.totalorder %s32, %s48
      %p50 = scmp.eq.s32.totalorder %s24, 0
      %p51 = por %p49, %p50
      %s53 = sadd.s32 %s52, 1
      %p56 = scmp.eq.s32.totalorder %s18, 3
      %p57 = scmp.ne.s32.totalorder %s52, %s54
      %p58 = scmp.eq.s32.totalorder %s18, 0
      %p59 = por %p57, %p58
      %p60 = scmp.ne.s32.totalorder %s52, %s54
      %p61 = scmp.eq.s32.totalorder %s23, 3
      %p62 = por %p60, %p61
      %p63 = scmp.ne.s32.totalorder %s54, %s55
      %p64 = scmp.eq.s32.totalorder %s23, 0
      %p65 = por %p63, %p64
      %p66 = scmp.ne.s32.totalorder %s54, %s55
      %p67 = scmp.eq.s32.totalorder %s24, 3
      %p68 = por %p66, %p67
      %p70 = scmp.ne.s32.totalorder %s55, %s69
      %p71 = scmp.eq.s32.totalorder %s24, 0
      %p72 = por %p70, %p71
      %s74 = sadd.s32 %s73, 1
      %p77 = scmp.eq.s32.totalorder %s18, 3
      %p78 = scmp.ne.s32.totalorder %s73, %s75
      %p79 = scmp.eq.s32.totalorder %s18, 0
      %p80 = por %p78, %p79
      %p81 = scmp.ne.s32.totalorder %s73, %s75
      %p82 = scmp.eq.s32.totalorder %s23, 3
      %p83 = por %p81, %p82
      %p84 = scmp.ne.s32.totalorder %s75, %s76
      %p85 = scmp.eq.s32.totalorder %s23, 0
      %p86 = por %p84, %p85
      %p87 = scmp.ne.s32.totalorder %s75, %s76
      %p88 = scmp.eq.s32.totalorder %s24, 3
      %p89 = por %p87, %p88
      %p91 = scmp.ne.s32.totalorder %s76, %s90
      %p92 = scmp.eq.s32.totalorder %s24, 0
      %p93 = por %p91, %p92
      %s95 = sadd.s32 %s94, 1
      %p98 = scmp.eq.s32.totalorder %s18, 3
      %p99 = scmp.ne.s32.totalorder %s94, %s96
      %p100 = scmp.eq.s32.totalorder %s18, 0
      %p101 = por %p99, %p100
      %p102 = scmp.ne.s32.totalorder %s94, %s96
      %p103 = scmp.eq.s32.totalorder %s23, 3
      %p104 = por %p102, %p103
      %p105 = scmp.ne.s32.totalorder %s96, %s97
      %p106 = scmp.eq.s32.totalorder %s23, 0
      %p107 = por %p105, %p106
      %p108 = scmp.ne.s32.totalorder %s96, %s97
      %p109 = scmp.eq.s32.totalorder %s24, 3
      %p110 = por %p108, %p109
      %p112 = scmp.ne.s32.totalorder %s97, %s111
      %p113 = scmp.eq.s32.totalorder %s24, 0
      %p114 = por %p112, %p113
      %s116 = sadd.s32 %s115, 1
      %p119 = scmp.eq.s32.totalorder %s18, 3
      %p120 = scmp.ne.s32.totalorder %s115, %s117
      %p121 = scmp.eq.s32.totalorder %s18, 0
      %p122 = por %p120, %p121
      %p123 = scmp.ne.s32.totalorder %s115, %s117
      %p124 = scmp.eq.s32.totalorder %s23, 3
      %p125 = por %p123, %p124
      %p126 = scmp.ne.s32.totalorder %s117, %s118
      %p127 = scmp.eq.s32.totalorder %s23, 0
      %p128 = por %p126, %p127
      %p129 = scmp.ne.s32.totalorder %s117, %s118
      %p130 = scmp.eq.s32.totalorder %s24, 3
      %p131 = por %p129, %p130
      %p133 = scmp.ne.s32.totalorder %s118, %s132
      %p134 = scmp.eq.s32.totalorder %s24, 0
      %p135 = por %p133, %p134
      %s137 = sadd.s32 %s136, 1
      %p140 = scmp.eq.s32.totalorder %s18, 3
      %p141 = scmp.ne.s32.totalorder %s136, %s138
      %p142 = scmp.eq.s32.totalorder %s18, 0
      %p143 = por %p141, %p142
      %p144 = scmp.ne.s32.totalorder %s136, %s138
      %p145 = scmp.eq.s32.totalorder %s23, 3
      %p146 = por %p144, %p145
      %p147 = scmp.ne.s32.totalorder %s138, %s139
      %p148 = scmp.eq.s32.totalorder %s23, 0
      %p149 = por %p147, %p148
      %p150 = scmp.ne.s32.totalorder %s138, %s139
      %p151 = scmp.eq.s32.totalorder %s24, 3
      %p152 = por %p150, %p151
      %p154 = scmp.ne.s32.totalorder %s139, %s153
      %p155 = scmp.eq.s32.totalorder %s24, 0
      %p156 = por %p154, %p155
      %s158 = sadd.s32 %s157, 1
      %p161 = scmp.eq.s32.totalorder %s18, 3
      %p162 = scmp.ne.s32.totalorder %s157, %s159
      %p163 = scmp.eq.s32.totalorder %s18, 0
      %p164 = por %p162, %p163
      %p165 = scmp.ne.s32.totalorder %s157, %s159
      %p166 = scmp.eq.s32.totalorder %s23, 3
      %p167 = por %p165, %p166
      %p168 = scmp.ne.s32.totalorder %s159, %s160
      %p169 = scmp.eq.s32.totalorder %s23, 0
      %p170 = por %p168, %p169
      %p171 = scmp.ne.s32.totalorder %s159, %s160
      %p172 = scmp.eq.s32.totalorder %s24, 3
      %p173 = por %p171, %p172
      %p175 = scmp.ne.s32.totalorder %s160, %s174
      %p176 = scmp.eq.s32.totalorder %s24, 0
      %p177 = por %p175, %p176
      %s178 = ssub.s32 %s18, %s25
      %p179 = scmp.eq.s32.totalorder %s178, 0
      %s181 = sadd.s32 %s180, 1
      %s182 = scalar_select %p179, %s180, %s181
      %p185 = pneg %p179
      %p186 = scmp.eq.s32.totalorder %s18, 3
      %p187 = por %p185, %p186
      %p188 = scmp.ne.s32.totalorder %s180, %s183
      %p189 = scmp.eq.s32.totalorder %s18, 0
      %p190 = por %p188, %p189
      %p191 = scmp.ne.s32.totalorder %s180, %s183
      %p192 = scmp.eq.s32.totalorder %s23, 3
      %p193 = por %p191, %p192
      %p194 = scmp.ne.s32.totalorder %s183, %s184
      %p195 = scmp.eq.s32.totalorder %s23, 0
      %p196 = por %p194, %p195
      %p197 = scmp.ne.s32.totalorder %s183, %s184
      %p198 = scmp.eq.s32.totalorder %s24, 3
      %p199 = por %p197, %p198
      %p201 = scmp.ne.s32.totalorder %s184, %s200
      %p202 = scmp.eq.s32.totalorder %s24, 0
      %p203 = por %p201, %p202
      %p204 = scmp.le.s32.totalorder 1, %s18
      %p205 = scmp.lt.s32.totalorder %s18, 5
      %p206 = pnand %p204, %p205
      %p207 = pneg %p206
      // Predicated region
      $region9: #{tpu_custom_call.1} parent=5 // pred_check
        _
      $region10: #{tpu_custom_call.1} parent=5 // pred_check_branch
        %209 = sbr.rel (%p206) target = $region12
      $region11: #{tpu_custom_call.1} parent=5 // pred_region
        %s210 = ssub.s32 %s18, 1
        // Predicated region
        $region13: #{tpu_custom_call.1} parent=11 // pred_check
          %p211 = pneg %p65
        $region14: #{tpu_custom_call.1} parent=11 // pred_check_branch
          %213 = sbr.rel (%p211) target = $region16
        $region15: #{tpu_custom_call.1} parent=11 // pred_region
          _
        $region16: #{tpu_custom_call.1} parent=11 // pred_fallthru
          _
        // Predicated region
        $region17: #{tpu_custom_call.1} parent=11 // pred_check
          %p214 = pneg %p86
        $region18: #{tpu_custom_call.1} parent=11 // pred_check_branch
          %216 = sbr.rel (%p214) target = $region20
        $region19: #{tpu_custom_call.1} parent=11 // pred_region
          _
        $region20: #{tpu_custom_call.1} parent=11 // pred_fallthru
          _
        // Predicated region
        $region21: #{tpu_custom_call.1} parent=11 // pred_check
          %p217 = pneg %p107
        $region22: #{tpu_custom_call.1} parent=11 // pred_check_branch
          %219 = sbr.rel (%p217) target = $region24
        $region23: #{tpu_custom_call.1} parent=11 // pred_region
          %s221 = ssub.s32 4096, 4096
          %222 = vsyncadd [#allocation6], %s221
          %s223 = sshll.u32 [#allocation5], 4
          %s224 = int_to_ptr.vmem [resolvable:$true] %s223
          %229 = dma.hbm_to_vmem [thread:$0]  %s3, 4096, %s224, [#allocation6], 128, 128, 8
        $region24: #{tpu_custom_call.1} parent=11 // pred_fallthru
          _
        // Predicated region
        $region25: #{tpu_custom_call.1} parent=11 // pred_check
          %p230 = pneg %p128
        $region26: #{tpu_custom_call.1} parent=11 // pred_check_branch
          %232 = sbr.rel (%p230) target = $region28
        $region27: #{tpu_custom_call.1} parent=11 // pred_region
          _
        $region28: #{tpu_custom_call.1} parent=11 // pred_fallthru
          _
        // Predicated region
        $region29: #{tpu_custom_call.1} parent=11 // pred_check
          %p233 = pneg %p149
        $region30: #{tpu_custom_call.1} parent=11 // pred_check_branch
          %235 = sbr.rel (%p233) target = $region32
        $region31: #{tpu_custom_call.1} parent=11 // pred_region
          _
        $region32: #{tpu_custom_call.1} parent=11 // pred_fallthru
          _
        // Predicated region
        $region33: #{tpu_custom_call.1} parent=11 // pred_check
          %p236 = pneg %p170
        $region34: #{tpu_custom_call.1} parent=11 // pred_check_branch
          %238 = sbr.rel (%p236) target = $region36
        $region35: #{tpu_custom_call.1} parent=11 // pred_region
          _
        $region36: #{tpu_custom_call.1} parent=11 // pred_fallthru
          _
      $region12: #{tpu_custom_call.1} parent=5 // pred_fallthru
        _
      %p239 = scmp.lt.s32.totalorder %s18, 4
      // Predicated region
      $region37: #{tpu_custom_call.1} parent=5 // pred_check
        %p240 = pneg %p239
      $region38: #{tpu_custom_call.1} parent=5 // pred_check_branch
        %242 = sbr.rel (%p240) target = $region40
      $region39: #{tpu_custom_call.1} parent=5 // pred_region
        // Predicated region
        $region41: #{tpu_custom_call.1} parent=39 // pred_check
          %p243 = pneg %p38
        $region42: #{tpu_custom_call.1} parent=39 // pred_check_branch
          %245 = sbr.rel (%p243) target = $region44
        $region43: #{tpu_custom_call.1} parent=39 // pred_region
          %s246 = sand.u32 %s28, 1
          %s247 = scalar_lea.sflag [#allocation4], %s246
          %s248 = sand.u32 %s28, 1
          %s249 = smul.addr %s248, 256
          %s250 = scalar_lea.vmem [#allocation3], %s249
          %s251 = smul.u32 32, %s18
          %s253 = ssub.s32 4096, 4096
          %254 = vsyncadd %s247, %s253
          %s255 = smul.addr %s251, 128
          %s256 = scalar_lea.hbm %s0, %s255
          %s257 = sshll.u32 %s250, 4
          %s258 = int_to_ptr.vmem [resolvable:$true] %s257
          %263 = dma.hbm_to_vmem [thread:$0]  %s256, 4096, %s258, %s247, 128, 128, 8
        $region44: #{tpu_custom_call.1} parent=39 // pred_fallthru
          _
      $region40: #{tpu_custom_call.1} parent=5 // pred_fallthru
        _
      %p264 = scmp.le.s32.totalorder 1, %s18
      %p265 = scmp.lt.s32.totalorder %s18, 5
      %p266 = pnand %p264, %p265
      %p267 = pneg %p266
      // Predicated region
      $region45: #{tpu_custom_call.1} parent=5 // pred_check
        _
      $region46: #{tpu_custom_call.1} parent=5 // pred_check_branch
        %269 = sbr.rel (%p266) target = $region48
      $region47: #{tpu_custom_call.1} parent=5 // pred_region
        %s270 = ssub.s32 %s18, 1
        %s271 = sand.u32 %s31, 1
        %s272 = scalar_lea.sflag [#allocation4], %s271
        %s273 = sand.u32 %s31, 1
        %s274 = smul.addr %s273, 256
        %s275 = scalar_lea.vmem [#allocation3], %s274
        // Predicated region
        $region49: #{tpu_custom_call.1} parent=47 // pred_check
          %p276 = pneg %p44
        $region50: #{tpu_custom_call.1} parent=47 // pred_check_branch
          %278 = sbr.rel (%p276) target = $region52
        $region51: #{tpu_custom_call.1} parent=47 // pred_region
          %279 = dma.done %s272, 4096
        $region52: #{tpu_custom_call.1} parent=47 // pred_fallthru
          _
        // Predicated region
        $region53: #{tpu_custom_call.1} parent=47 // pred_check
          %p280 = pneg %p107
        $region54: #{tpu_custom_call.1} parent=47 // pred_check_branch
          %282 = sbr.rel (%p280) target = $region56
        $region55: #{tpu_custom_call.1} parent=47 // pred_region
          %283 = dma.done [#allocation6], 4096
        $region56: #{tpu_custom_call.1} parent=47 // pred_fallthru
          _
        %s284 = sand.u32 %s31, 1
        %s285 = scalar_lea.sflag [#allocation4], %s284
        %s286 = sand.u32 %s31, 1
        %s287 = smul.addr %s286, 256
        %s288 = scalar_lea.vmem [#allocation3], %s287
        %p289 = pneg %p44
        %p290 = pneg %p41
        %p291 = pneg %p65
        %p292 = pneg %p62
        %p293 = pneg %p86
        %p294 = pneg %p83
        %p295 = pneg %p107
        %p296 = pneg %p104
        %p297 = pneg %p128
        %p298 = pneg %p125
        %p299 = pneg %p149
        %p300 = pneg %p146
        %p301 = pneg %p170
        %p302 = pneg %p167
        %p303 = pneg %p196
        %p304 = pneg %p193
        %s305 = smul.u32 32, %s23
        %p306 = scmp.lt.s32.totalorder %s305, 127
        %s307 = scalar_select %p306, %s305, 127
        %s308 = smul.addr %s307, 8
        %s309 = scalar_lea.vmem %s7, %s308
        %s310 = smul.u32 32, %s23
        %s311 = smul.u32 32, %s23
        %p312 = scmp.lt.s32.totalorder %s311, 127
        %s313 = scalar_select %p312, %s311, 127
        %s314 = smul.addr %s313, 8
        %s315 = scalar_lea.vmem %s7, %s314
        %s316 = smul.u32 32, %s23
        %v318 = vld [vmem:[%s275] sm:$0xff]
        %v319 = vld [vmem:[%s275 + $0x8] sm:$0xff]
        %v320 = vld [vmem:[%s275 + $0x10] sm:$0xff]
        %v321 = vld [vmem:[%s275 + $0x18] sm:$0xff]
        %v322 = vld [vmem:[%s275 + $0x20] sm:$0xff]
        %v323 = vld [vmem:[%s275 + $0x28] sm:$0xff]
        %v324 = vld [vmem:[%s275 + $0x30] sm:$0xff]
        %v325 = vld [vmem:[%s275 + $0x38] sm:$0xff]
        %v326 = vld [vmem:[%s275 + $0x40] sm:$0xff]
        %v327 = vld [vmem:[%s275 + $0x48] sm:$0xff]
        %v328 = vld [vmem:[%s275 + $0x50] sm:$0xff]
        %v329 = vld [vmem:[%s275 + $0x58] sm:$0xff]
        %v330 = vld [vmem:[%s275 + $0x60] sm:$0xff]
        %v331 = vld [vmem:[%s275 + $0x68] sm:$0xff]
        %v332 = vld [vmem:[%s275 + $0x70] sm:$0xff]
        %v333 = vld [vmem:[%s275 + $0x78] sm:$0xff]
        %v334 = vld [vmem:[%s275 + $0x80] sm:$0xff]
        %v335 = vld [vmem:[%s275 + $0x88] sm:$0xff]
        %v336 = vld [vmem:[%s275 + $0x90] sm:$0xff]
        %v337 = vld [vmem:[%s275 + $0x98] sm:$0xff]
        %v338 = vld [vmem:[%s275 + $0xa0] sm:$0xff]
        %v339 = vld [vmem:[%s275 + $0xa8] sm:$0xff]
        %v340 = vld [vmem:[%s275 + $0xb0] sm:$0xff]
        %v341 = vld [vmem:[%s275 + $0xb8] sm:$0xff]
        %v342 = vld [vmem:[%s275 + $0xc0] sm:$0xff]
        %v343 = vld [vmem:[%s275 + $0xc8] sm:$0xff]
        %v344 = vld [vmem:[%s275 + $0xd0] sm:$0xff]
        %v345 = vld [vmem:[%s275 + $0xd8] sm:$0xff]
        %v346 = vld [vmem:[%s275 + $0xe0] sm:$0xff]
        %v347 = vld [vmem:[%s275 + $0xe8] sm:$0xff]
        %v348 = vld [vmem:[%s275 + $0xf0] sm:$0xff]
        %v349 = vld [vmem:[%s275 + $0xf8] sm:$0xff]
        %v350 = vpack.c.bf16 %v319, %v318
        %v351 = vpack.c.bf16 %v321, %v320
        %v352 = vpack.c.bf16 %v323, %v322
        %v353 = vpack.c.bf16 %v325, %v324
        %v354 = vpack.c.bf16 %v327, %v326
        %v355 = vpack.c.bf16 %v329, %v328
        %v356 = vpack.c.bf16 %v331, %v330
        %v357 = vpack.c.bf16 %v333, %v332
        %v358 = vpack.c.bf16 %v335, %v334
        %v359 = vpack.c.bf16 %v337, %v336
        %v360 = vpack.c.bf16 %v339, %v338
        %v361 = vpack.c.bf16 %v341, %v340
        %v362 = vpack.c.bf16 %v343, %v342
        %v363 = vpack.c.bf16 %v345, %v344
        %v364 = vpack.c.bf16 %v347, %v346
        %v365 = vpack.c.bf16 %v349, %v348
        %v366 = vld [vmem:[%s1] sm:$0xff]
        %v367 = vld [vmem:[%s1 + $0x8] sm:$0xff]
        %v368 = vld [vmem:[%s1 + $0x10] sm:$0xff]
        %v369 = vld [vmem:[%s1 + $0x18] sm:$0xff]
        %v370 = vld [vmem:[%s1 + $0x20] sm:$0xff]
        %v371 = vld [vmem:[%s1 + $0x28] sm:$0xff]
        %v372 = vld [vmem:[%s1 + $0x30] sm:$0xff]
        %v373 = vld [vmem:[%s1 + $0x38] sm:$0xff]
        %v374 = vld [vmem:[%s1 + $0x40] sm:$0xff]
        %v375 = vld [vmem:[%s1 + $0x48] sm:$0xff]
        %v376 = vld [vmem:[%s1 + $0x50] sm:$0xff]
        %v377 = vld [vmem:[%s1 + $0x58] sm:$0xff]
        %v378 = vld [vmem:[%s1 + $0x60] sm:$0xff]
        %v379 = vld [vmem:[%s1 + $0x68] sm:$0xff]
        %v380 = vld [vmem:[%s1 + $0x70] sm:$0xff]
        %v381 = vld [vmem:[%s1 + $0x78] sm:$0xff]
        %v382 = vld [vmem:[%s2] sm:$0x3]
        %v384 = vlaneseq
        %v385 = vshrl.u32 %v384, 7
        %v386 = vsub.s32 0, %v385
        %v387 = vrot.slane %v382, %v386
        %v388 = vlaneseq
        %v389 = vshrl.u32 %v388, 7
        %v390 = vsub.s32 1, %v389
        %v391 = vrot.slane %v382, %v390
        %v410 = vunpack.c.l.b16 %v366
        %v411 = vunpack.c.h.b16 %v366
        %v412 = vunpack.c.l.b16 %v367
        %v413 = vunpack.c.h.b16 %v367
        %v414 = vunpack.c.l.b16 %v368
        %v415 = vunpack.c.h.b16 %v368
        %v416 = vunpack.c.l.b16 %v369
        %v417 = vunpack.c.h.b16 %v369
        %v418 = vunpack.c.l.b16 %v370
        %v419 = vunpack.c.h.b16 %v370
        %v420 = vunpack.c.l.b16 %v371
        %v421 = vunpack.c.h.b16 %v371
        %v422 = vunpack.c.l.b16 %v372
        %v423 = vunpack.c.h.b16 %v372
        %v424 = vunpack.c.l.b16 %v373
        %v425 = vunpack.c.h.b16 %v373
        %v426 = vunpack.c.l.b16 %v374
        %v427 = vunpack.c.h.b16 %v374
        %v428 = vunpack.c.l.b16 %v375
        %v429 = vunpack.c.h.b16 %v375
        %v430 = vunpack.c.l.b16 %v376
        %v431 = vunpack.c.h.b16 %v376
        %v432 = vunpack.c.l.b16 %v377
        %v433 = vunpack.c.h.b16 %v377
        %v434 = vunpack.c.l.b16 %v378
        %v435 = vunpack.c.h.b16 %v378
        %v436 = vunpack.c.l.b16 %v379
        %v437 = vunpack.c.h.b16 %v379
        %v438 = vunpack.c.l.b16 %v380
        %v439 = vunpack.c.h.b16 %v380
        %v440 = vunpack.c.l.b16 %v381
        %v441 = vunpack.c.h.b16 %v381
        %v442 = vpack.c.b16 %v412, %v410
        %v443 = vpack.c.b16 %v413, %v411
        %v444 = vpack.c.b16 %v416, %v414
        %v445 = vpack.c.b16 %v417, %v415
        %v446 = vpack.c.b16 %v420, %v418
        %v447 = vpack.c.b16 %v421, %v419
        %v448 = vpack.c.b16 %v424, %v422
        %v449 = vpack.c.b16 %v425, %v423
        %v450 = vpack.c.b16 %v428, %v426
        %v451 = vpack.c.b16 %v429, %v427
        %v452 = vpack.c.b16 %v432, %v430
        %v453 = vpack.c.b16 %v433, %v431
        %v454 = vpack.c.b16 %v436, %v434
        %v455 = vpack.c.b16 %v437, %v435
        %v456 = vpack.c.b16 %v440, %v438
        %v457 = vpack.c.b16 %v441, %v439
        %474 = vmatprep.subr.bf16.mxu0 %v457
        %475 = vmatpush1.bf16.msra.mxu0 %v456
        %476 = vmatprep.subr.bf16.mxu0 %v455
        %477 = vmatpush1.bf16.msra.mxu0 %v454
        %478 = vmatprep.subr.bf16.mxu0 %v453
        %479 = vmatpush1.bf16.msra.mxu0 %v452
        %480 = vmatprep.subr.bf16.mxu0 %v451
        %481 = vmatpush1.bf16.msra.mxu0 %v450
        %482 = vmatprep.subr.bf16.mxu0 %v449
        %483 = vmatpush1.bf16.msra.mxu0 %v448
        %484 = vmatprep.subr.bf16.mxu0 %v447
        %485 = vmatpush1.bf16.msra.mxu0 %v446
        %486 = vmatprep.subr.bf16.mxu0 %v445
        %487 = vmatpush1.bf16.msra.mxu0 %v444
        %488 = vmatprep.subr.bf16.mxu0 %v443
        %489 = vmatpush1.bf16.msra.mxu0 %v442
        %490 = vmatprep.subr.bf16.mxu0 0
        %491 = vmatpush2.bf16.msra.mxu0 0
        %492 = vmatprep.subr.bf16.mxu0 0
        %493 = vmatpush2.bf16.msra.mxu0 0
        %494 = vmatprep.subr.bf16.mxu0 0
        %495 = vmatpush2.bf16.msra.mxu0 0
        %496 = vmatprep.subr.bf16.mxu0 0
        %497 = vmatpush2.bf16.msra.mxu0 0
        %498 = vmatprep.subr.bf16.mxu0 0
        %499 = vmatpush2.bf16.msra.mxu0 0
        %500 = vmatprep.subr.bf16.mxu0 0
        %501 = vmatpush2.bf16.msra.mxu0 0
        %502 = vmatprep.subr.bf16.mxu0 0
        %503 = vmatpush2.bf16.msra.mxu0 0
        %504 = vmatprep.subr.bf16.mxu0 0
        %505 = vmatpush2.bf16.msra.mxu0 0
        %506 = vmatprep.mubr.bf16.mxu0 0
        %507 = vmatmul.mubr.bf16.gmra.mxu0 %v350
        %v508 = vpop.f32.mrf.mxu0
        %v509 = vadd.f32 %v387, %v508
        %v510 = vpop.f32.mrf.mxu0
        %v511 = vadd.f32 %v391, %v510
        %v512 = vpop.f32.mrf.mxu0
        %v513 = vadd.f32 %v387, %v512
        %v514 = vpop.f32.mrf.mxu0
        %v515 = vadd.f32 %v391, %v514
        %516 = vmatprep.mubr.bf16.mxu0 0
        %517 = vmatmul.mubr.bf16.gmra.mxu0 %v351
        %v518 = vpop.f32.mrf.mxu0
        %v519 = vadd.f32 %v387, %v518
        %v520 = vpop.f32.mrf.mxu0
        %v521 = vadd.f32 %v391, %v520
        %v522 = vpop.f32.mrf.mxu0
        %v523 = vadd.f32 %v387, %v522
        %v524 = vpop.f32.mrf.mxu0
        %v525 = vadd.f32 %v391, %v524
        %526 = vmatprep.mubr.bf16.mxu0 0
        %527 = vmatmul.mubr.bf16.gmra.mxu0 %v352
        %v528 = vpop.f32.mrf.mxu0
        %v529 = vadd.f32 %v387, %v528
        %v530 = vpop.f32.mrf.mxu0
        %v531 = vadd.f32 %v391, %v530
        %v532 = vpop.f32.mrf.mxu0
        %v533 = vadd.f32 %v387, %v532
        %v534 = vpop.f32.mrf.mxu0
        %v535 = vadd.f32 %v391, %v534
        %536 = vmatprep.mubr.bf16.mxu0 0
        %537 = vmatmul.mubr.bf16.gmra.mxu0 %v353
        %v538 = vpop.f32.mrf.mxu0
        %v539 = vadd.f32 %v387, %v538
        %v540 = vpop.f32.mrf.mxu0
        %v541 = vadd.f32 %v391, %v540
        %v542 = vpop.f32.mrf.mxu0
        %v543 = vadd.f32 %v387, %v542
        %v544 = vpop.f32.mrf.mxu0
        %v545 = vadd.f32 %v391, %v544
        %546 = vmatprep.mubr.bf16.mxu0 0
        %547 = vmatmul.mubr.bf16.gmra.mxu0 %v354
        %v548 = vpop.f32.mrf.mxu0
        %v549 = vadd.f32 %v387, %v548
        %v550 = vpop.f32.mrf.mxu0
        %v551 = vadd.f32 %v391, %v550
        %v552 = vpop.f32.mrf.mxu0
        %v553 = vadd.f32 %v387, %v552
        %v554 = vpop.f32.mrf.mxu0
        %v555 = vadd.f32 %v391, %v554
        %556 = vmatprep.mubr.bf16.mxu0 0
        %557 = vmatmul.mubr.bf16.gmra.mxu0 %v355
        %v558 = vpop.f32.mrf.mxu0
        %v559 = vadd.f32 %v387, %v558
        %v560 = vpop.f32.mrf.mxu0
        %v561 = vadd.f32 %v391, %v560
        %v562 = vpop.f32.mrf.mxu0
        %v563 = vadd.f32 %v387, %v562
        %v564 = vpop.f32.mrf.mxu0
        %v565 = vadd.f32 %v391, %v564
        %566 = vmatprep.mubr.bf16.mxu0 0
        %567 = vmatmul.mubr.bf16.gmra.mxu0 %v356
        %v568 = vpop.f32.mrf.mxu0
        %v569 = vadd.f32 %v387, %v568
        %v570 = vpop.f32.mrf.mxu0
        %v571 = vadd.f32 %v391, %v570
        %v572 = vpop.f32.mrf.mxu0
        %v573 = vadd.f32 %v387, %v572
        %v574 = vpop.f32.mrf.mxu0
        %v575 = vadd.f32 %v391, %v574
        %576 = vmatprep.mubr.bf16.mxu0 0
        %577 = vmatmul.mubr.bf16.gmra.mxu0 %v357
        %v578 = vpop.f32.mrf.mxu0
        %v579 = vadd.f32 %v387, %v578
        %v580 = vpop.f32.mrf.mxu0
        %v581 = vadd.f32 %v391, %v580
        %v582 = vpop.f32.mrf.mxu0
        %v583 = vadd.f32 %v387, %v582
        %v584 = vpop.f32.mrf.mxu0
        %v585 = vadd.f32 %v391, %v584
        %586 = vmatprep.mubr.bf16.mxu0 0
        %587 = vmatmul.mubr.bf16.gmra.mxu0 %v358
        %v588 = vpop.f32.mrf.mxu0
        %v589 = vadd.f32 %v387, %v588
        %v590 = vpop.f32.mrf.mxu0
        %v591 = vadd.f32 %v391, %v590
        %v592 = vpop.f32.mrf.mxu0
        %v593 = vadd.f32 %v387, %v592
        %v594 = vpop.f32.mrf.mxu0
        %v595 = vadd.f32 %v391, %v594
        %596 = vmatprep.mubr.bf16.mxu0 0
        %597 = vmatmul.mubr.bf16.gmra.mxu0 %v359
        %v598 = vpop.f32.mrf.mxu0
        %v599 = vadd.f32 %v387, %v598
        %v600 = vpop.f32.mrf.mxu0
        %v601 = vadd.f32 %v391, %v600
        %v602 = vpop.f32.mrf.mxu0
        %v603 = vadd.f32 %v387, %v602
        %v604 = vpop.f32.mrf.mxu0
        %v605 = vadd.f32 %v391, %v604
        %606 = vmatprep.mubr.bf16.mxu0 0
        %607 = vmatmul.mubr.bf16.gmra.mxu0 %v360
        %v608 = vpop.f32.mrf.mxu0
        %v609 = vadd.f32 %v387, %v608
        %v610 = vpop.f32.mrf.mxu0
        %v611 = vadd.f32 %v391, %v610
        %v612 = vpop.f32.mrf.mxu0
        %v613 = vadd.f32 %v387, %v612
        %v614 = vpop.f32.mrf.mxu0
        %v615 = vadd.f32 %v391, %v614
        %616 = vmatprep.mubr.bf16.mxu0 0
        %617 = vmatmul.mubr.bf16.gmra.mxu0 %v361
        %v618 = vpop.f32.mrf.mxu0
        %v619 = vadd.f32 %v387, %v618
        %v620 = vpop.f32.mrf.mxu0
        %v621 = vadd.f32 %v391, %v620
        %v622 = vpop.f32.mrf.mxu0
        %v623 = vadd.f32 %v387, %v622
        %v624 = vpop.f32.mrf.mxu0
        %v625 = vadd.f32 %v391, %v624
        %626 = vmatprep.mubr.bf16.mxu0 0
        %627 = vmatmul.mubr.bf16.gmra.mxu0 %v362
        %v628 = vpop.f32.mrf.mxu0
        %v629 = vadd.f32 %v387, %v628
        %v630 = vpop.f32.mrf.mxu0
        %v631 = vadd.f32 %v391, %v630
        %v632 = vpop.f32.mrf.mxu0
        %v633 = vadd.f32 %v387, %v632
        %v634 = vpop.f32.mrf.mxu0
        %v635 = vadd.f32 %v391, %v634
        %636 = vmatprep.mubr.bf16.mxu0 0
        %637 = vmatmul.mubr.bf16.gmra.mxu0 %v363
        %v638 = vpop.f32.mrf.mxu0
        %v639 = vadd.f32 %v387, %v638
        %v640 = vpop.f32.mrf.mxu0
        %v641 = vadd.f32 %v391, %v640
        %v642 = vpop.f32.mrf.mxu0
        %v643 = vadd.f32 %v387, %v642
        %v644 = vpop.f32.mrf.mxu0
        %v645 = vadd.f32 %v391, %v644
        %646 = vmatprep.mubr.bf16.mxu0 0
        %647 = vmatmul.mubr.bf16.gmra.mxu0 %v364
        %v648 = vpop.f32.mrf.mxu0
        %v649 = vadd.f32 %v387, %v648
        %v650 = vpop.f32.mrf.mxu0
        %v651 = vadd.f32 %v391, %v650
        %v652 = vpop.f32.mrf.mxu0
        %v653 = vadd.f32 %v387, %v652
        %v654 = vpop.f32.mrf.mxu0
        %v655 = vadd.f32 %v391, %v654
        %656 = vmatprep.mubr.bf16.mxu0 0
        %657 = vmatmul.mubr.bf16.gmra.mxu0 %v365
        %v658 = vpop.f32.mrf.mxu0
        %v659 = vadd.f32 %v387, %v658
        %v660 = vpop.f32.mrf.mxu0
        %v661 = vadd.f32 %v391, %v660
        %v662 = vpop.f32.mrf.mxu0
        %v663 = vadd.f32 %v387, %v662
        %v664 = vpop.f32.mrf.mxu0
        %v665 = vadd.f32 %v391, %v664
        %666 = vdwg.mxu0
        %v667 = vmax.f32 %v509, 0.0
        %v668 = vmax.f32 %v511, 0.0
        %v669 = vmax.f32 %v513, 0.0
        %v670 = vmax.f32 %v515, 0.0
        %v671 = vmax.f32 %v519, 0.0
        %v672 = vmax.f32 %v521, 0.0
        %v673 = vmax.f32 %v523, 0.0
        %v674 = vmax.f32 %v525, 0.0
        %v675 = vmax.f32 %v529, 0.0
        %v676 = vmax.f32 %v531, 0.0
        %v677 = vmax.f32 %v533, 0.0
        %v678 = vmax.f32 %v535, 0.0
        %v679 = vmax.f32 %v539, 0.0
        %v680 = vmax.f32 %v541, 0.0
        %v681 = vmax.f32 %v543, 0.0
        %v682 = vmax.f32 %v545, 0.0
        %v683 = vmax.f32 %v549, 0.0
        %v684 = vmax.f32 %v551, 0.0
        %v685 = vmax.f32 %v553, 0.0
        %v686 = vmax.f32 %v555, 0.0
        %v687 = vmax.f32 %v559, 0.0
        %v688 = vmax.f32 %v561, 0.0
        %v689 = vmax.f32 %v563, 0.0
        %v690 = vmax.f32 %v565, 0.0
        %v691 = vmax.f32 %v569, 0.0
        %v692 = vmax.f32 %v571, 0.0
        %v693 = vmax.f32 %v573, 0.0
        %v694 = vmax.f32 %v575, 0.0
        %v695 = vmax.f32 %v579, 0.0
        %v696 = vmax.f32 %v581, 0.0
        %v697 = vmax.f32 %v583, 0.0
        %v698 = vmax.f32 %v585, 0.0
        %v699 = vmax.f32 %v589, 0.0
        %v700 = vmax.f32 %v591, 0.0
        %v701 = vmax.f32 %v593, 0.0
        %v702 = vmax.f32 %v595, 0.0
        %v703 = vmax.f32 %v599, 0.0
        %v704 = vmax.f32 %v601, 0.0
        %v705 = vmax.f32 %v603, 0.0
        %v706 = vmax.f32 %v605, 0.0
        %v707 = vmax.f32 %v609, 0.0
        %v708 = vmax.f32 %v611, 0.0
        %v709 = vmax.f32 %v613, 0.0
        %v710 = vmax.f32 %v615, 0.0
        %v711 = vmax.f32 %v619, 0.0
        %v712 = vmax.f32 %v621, 0.0
        %v713 = vmax.f32 %v623, 0.0
        %v714 = vmax.f32 %v625, 0.0
        %v715 = vmax.f32 %v629, 0.0
        %v716 = vmax.f32 %v631, 0.0
        %v717 = vmax.f32 %v633, 0.0
        %v718 = vmax.f32 %v635, 0.0
        %v719 = vmax.f32 %v639, 0.0
        %v720 = vmax.f32 %v641, 0.0
        %v721 = vmax.f32 %v643, 0.0
        %v722 = vmax.f32 %v645, 0.0
        %v723 = vmax.f32 %v649, 0.0
        %v724 = vmax.f32 %v651, 0.0
        %v725 = vmax.f32 %v653, 0.0
        %v726 = vmax.f32 %v655, 0.0
        %v727 = vmax.f32 %v659, 0.0
        %v728 = vmax.f32 %v661, 0.0
        %v729 = vmax.f32 %v663, 0.0
        %v730 = vmax.f32 %v665, 0.0
        %v731 = vpack.c.bf16 %v669, %v667
        %v732 = vpack.c.bf16 %v670, %v668
        %v733 = vpack.c.bf16 %v673, %v671
        %v734 = vpack.c.bf16 %v674, %v672
        %v735 = vpack.c.bf16 %v677, %v675
        %v736 = vpack.c.bf16 %v678, %v676
        %v737 = vpack.c.bf16 %v681, %v679
        %v738 = vpack.c.bf16 %v682, %v680
        %v739 = vpack.c.bf16 %v685, %v683
        %v740 = vpack.c.bf16 %v686, %v684
        %v741 = vpack.c.bf16 %v689, %v687
        %v742 = vpack.c.bf16 %v690, %v688
        %v743 = vpack.c.bf16 %v693, %v691
        %v744 = vpack.c.bf16 %v694, %v692
        %v745 = vpack.c.bf16 %v697, %v695
        %v746 = vpack.c.bf16 %v698, %v696
        %v747 = vpack.c.bf16 %v701, %v699
        %v748 = vpack.c.bf16 %v702, %v700
        %v749 = vpack.c.bf16 %v705, %v703
        %v750 = vpack.c.bf16 %v706, %v704
        %v751 = vpack.c.bf16 %v709, %v707
        %v752 = vpack.c.bf16 %v710, %v708
        %v753 = vpack.c.bf16 %v713, %v711
        %v754 = vpack.c.bf16 %v714, %v712
        %v755 = vpack.c.bf16 %v717, %v715
        %v756 = vpack.c.bf16 %v718, %v716
        %v757 = vpack.c.bf16 %v721, %v719
        %v758 = vpack.c.bf16 %v722, %v720
        %v759 = vpack.c.bf16 %v725, %v723
        %v760 = vpack.c.bf16 %v726, %v724
        %v761 = vpack.c.bf16 %v729, %v727
        %v762 = vpack.c.bf16 %v730, %v728
        %v763 = vld [vmem:[#allocation5] sm:$0xff]
        %v764 = vld [vmem:[#allocation5 + $0x8] sm:$0xff]
        %v765 = vld [vmem:[#allocation5 + $0x10] sm:$0xff]
        %v766 = vld [vmem:[#allocation5 + $0x18] sm:$0xff]
        %v767 = vld [vmem:[#allocation5 + $0x20] sm:$0xff]
        %v768 = vld [vmem:[#allocation5 + $0x28] sm:$0xff]
        %v769 = vld [vmem:[#allocation5 + $0x30] sm:$0xff]
        %v770 = vld [vmem:[#allocation5 + $0x38] sm:$0xff]
        %v771 = vld [vmem:[#allocation5 + $0x40] sm:$0xff]
        %v772 = vld [vmem:[#allocation5 + $0x48] sm:$0xff]
        %v773 = vld [vmem:[#allocation5 + $0x50] sm:$0xff]
        %v774 = vld [vmem:[#allocation5 + $0x58] sm:$0xff]
        %v775 = vld [vmem:[#allocation5 + $0x60] sm:$0xff]
        %v776 = vld [vmem:[#allocation5 + $0x68] sm:$0xff]
        %v777 = vld [vmem:[#allocation5 + $0x70] sm:$0xff]
        %v778 = vld [vmem:[#allocation5 + $0x78] sm:$0xff]
        %v779 = vld [vmem:[#allocation5 + $0x80] sm:$0xff]
        %v780 = vld [vmem:[#allocation5 + $0x88] sm:$0xff]
        %v781 = vld [vmem:[#allocation5 + $0x90] sm:$0xff]
        %v782 = vld [vmem:[#allocation5 + $0x98] sm:$0xff]
        %v783 = vld [vmem:[#allocation5 + $0xa0] sm:$0xff]
        %v784 = vld [vmem:[#allocation5 + $0xa8] sm:$0xff]
        %v785 = vld [vmem:[#allocation5 + $0xb0] sm:$0xff]
        %v786 = vld [vmem:[#allocation5 + $0xb8] sm:$0xff]
        %v787 = vld [vmem:[#allocation5 + $0xc0] sm:$0xff]
        %v788 = vld [vmem:[#allocation5 + $0xc8] sm:$0xff]
        %v789 = vld [vmem:[#allocation5 + $0xd0] sm:$0xff]
        %v790 = vld [vmem:[#allocation5 + $0xd8] sm:$0xff]
        %v791 = vld [vmem:[#allocation5 + $0xe0] sm:$0xff]
        %v792 = vld [vmem:[#allocation5 + $0xe8] sm:$0xff]
        %v793 = vld [vmem:[#allocation5 + $0xf0] sm:$0xff]
        %v794 = vld [vmem:[#allocation5 + $0xf8] sm:$0xff]
        %v795 = vld [vmem:[%s4] sm:$0x3]
        %v797 = vlaneseq
        %v798 = vshrl.u32 %v797, 7
        %v799 = vsub.s32 0, %v798
        %v800 = vrot.slane %v795, %v799
        %v801 = vlaneseq
        %v802 = vshrl.u32 %v801, 7
        %v803 = vsub.s32 1, %v802
        %v804 = vrot.slane %v795, %v803
        %v839 = vunpack.c.l.b16 %v763
        %v840 = vunpack.c.h.b16 %v763
        %v841 = vunpack.c.l.b16 %v764
        %v842 = vunpack.c.h.b16 %v764
        %v843 = vunpack.c.l.b16 %v765
        %v844 = vunpack.c.h.b16 %v765
        %v845 = vunpack.c.l.b16 %v766
        %v846 = vunpack.c.h.b16 %v766
        %v847 = vunpack.c.l.b16 %v767
        %v848 = vunpack.c.h.b16 %v767
        %v849 = vunpack.c.l.b16 %v768
        %v850 = vunpack.c.h.b16 %v768
        %v851 = vunpack.c.l.b16 %v769
        %v852 = vunpack.c.h.b16 %v769
        %v853 = vunpack.c.l.b16 %v770
        %v854 = vunpack.c.h.b16 %v770
        %v855 = vunpack.c.l.b16 %v771
        %v856 = vunpack.c.h.b16 %v771
        %v857 = vunpack.c.l.b16 %v772
        %v858 = vunpack.c.h.b16 %v772
        %v859 = vunpack.c.l.b16 %v773
        %v860 = vunpack.c.h.b16 %v773
        %v861 = vunpack.c.l.b16 %v774
        %v862 = vunpack.c.h.b16 %v774
        %v863 = vunpack.c.l.b16 %v775
        %v864 = vunpack.c.h.b16 %v775
        %v865 = vunpack.c.l.b16 %v776
        %v866 = vunpack.c.h.b16 %v776
        %v867 = vunpack.c.l.b16 %v777
        %v868 = vunpack.c.h.b16 %v777
        %v869 = vunpack.c.l.b16 %v778
        %v870 = vunpack.c.h.b16 %v778
        %v871 = vunpack.c.l.b16 %v779
        %v872 = vunpack.c.h.b16 %v779
        %v873 = vunpack.c.l.b16 %v780
        %v874 = vunpack.c.h.b16 %v780
        %v875 = vunpack.c.l.b16 %v781
        %v876 = vunpack.c.h.b16 %v781
        %v877 = vunpack.c.l.b16 %v782
        %v878 = vunpack.c.h.b16 %v782
        %v879 = vunpack.c.l.b16 %v783
        %v880 = vunpack.c.h.b16 %v783
        %v881 = vunpack.c.l.b16 %v784
        %v882 = vunpack.c.h.b16 %v784
        %v883 = vunpack.c.l.b16 %v785
        %v884 = vunpack.c.h.b16 %v785
        %v885 = vunpack.c.l.b16 %v786
        %v886 = vunpack.c.h.b16 %v786
        %v887 = vunpack.c.l.b16 %v787
        %v888 = vunpack.c.h.b16 %v787
        %v889 = vunpack.c.l.b16 %v788
        %v890 = vunpack.c.h.b16 %v788
        %v891 = vunpack.c.l.b16 %v789
        %v892 = vunpack.c.h.b16 %v789
        %v893 = vunpack.c.l.b16 %v790
        %v894 = vunpack.c.h.b16 %v790
        %v895 = vunpack.c.l.b16 %v791
        %v896 = vunpack.c.h.b16 %v791
        %v897 = vunpack.c.l.b16 %v792
        %v898 = vunpack.c.h.b16 %v792
        %v899 = vunpack.c.l.b16 %v793
        %v900 = vunpack.c.h.b16 %v793
        %v901 = vunpack.c.l.b16 %v794
        %v902 = vunpack.c.h.b16 %v794
        %v903 = vpack.c.b16 %v841, %v839
        %v904 = vpack.c.b16 %v842, %v840
        %v905 = vpack.c.b16 %v845, %v843
        %v906 = vpack.c.b16 %v846, %v844
        %v907 = vpack.c.b16 %v849, %v847
        %v908 = vpack.c.b16 %v850, %v848
        %v909 = vpack.c.b16 %v853, %v851
        %v910 = vpack.c.b16 %v854, %v852
        %v911 = vpack.c.b16 %v857, %v855
        %v912 = vpack.c.b16 %v858, %v856
        %v913 = vpack.c.b16 %v861, %v859
        %v914 = vpack.c.b16 %v862, %v860
        %v915 = vpack.c.b16 %v865, %v863
        %v916 = vpack.c.b16 %v866, %v864
        %v917 = vpack.c.b16 %v869, %v867
        %v918 = vpack.c.b16 %v870, %v868
        %v919 = vpack.c.b16 %v873, %v871
        %v920 = vpack.c.b16 %v874, %v872
        %v921 = vpack.c.b16 %v877, %v875
        %v922 = vpack.c.b16 %v878, %v876
        %v923 = vpack.c.b16 %v881, %v879
        %v924 = vpack.c.b16 %v882, %v880
        %v925 = vpack.c.b16 %v885, %v883
        %v926 = vpack.c.b16 %v886, %v884
        %v927 = vpack.c.b16 %v889, %v887
        %v928 = vpack.c.b16 %v890, %v888
        %v929 = vpack.c.b16 %v893, %v891
        %v930 = vpack.c.b16 %v894, %v892
        %v931 = vpack.c.b16 %v897, %v895
        %v932 = vpack.c.b16 %v898, %v896
        %v933 = vpack.c.b16 %v901, %v899
        %v934 = vpack.c.b16 %v902, %v900
        %967 = vmatprep.subr.bf16.mxu0 %v918
        %968 = vmatpush1.bf16.msra.mxu0 %v917
        %969 = vmatprep.subr.bf16.mxu0 %v916
        %970 = vmatpush1.bf16.msra.mxu0 %v915
        %971 = vmatprep.subr.bf16.mxu0 %v914
        %972 = vmatpush1.bf16.msra.mxu0 %v913
        %973 = vmatprep.subr.bf16.mxu0 %v912
        %974 = vmatpush1.bf16.msra.mxu0 %v911
        %975 = vmatprep.subr.bf16.mxu0 %v910
        %976 = vmatpush1.bf16.msra.mxu0 %v909
        %977 = vmatprep.subr.bf16.mxu0 %v908
        %978 = vmatpush1.bf16.msra.mxu0 %v907
        %979 = vmatprep.subr.bf16.mxu0 %v906
        %980 = vmatpush1.bf16.msra.mxu0 %v905
        %981 = vmatprep.subr.bf16.mxu0 %v904
        %982 = vmatpush1.bf16.msra.mxu0 %v903
        %983 = vmatprep.subr.bf16.mxu0 %v934
        %984 = vmatpush2.bf16.msra.mxu0 %v933
        %985 = vmatprep.subr.bf16.mxu0 %v932
        %986 = vmatpush2.bf16.msra.mxu0 %v931
        %987 = vmatprep.subr.bf16.mxu0 %v930
        %988 = vmatpush2.bf16.msra.mxu0 %v929
        %989 = vmatprep.subr.bf16.mxu0 %v928
        %990 = vmatpush2.bf16.msra.mxu0 %v927
        %991 = vmatprep.subr.bf16.mxu0 %v926
        %992 = vmatpush2.bf16.msra.mxu0 %v925
        %993 = vmatprep.subr.bf16.mxu0 %v924
        %994 = vmatpush2.bf16.msra.mxu0 %v923
        %995 = vmatprep.subr.bf16.mxu0 %v922
        %996 = vmatpush2.bf16.msra.mxu0 %v921
        %997 = vmatprep.subr.bf16.mxu0 %v920
        %998 = vmatpush2.bf16.msra.mxu0 %v919
        %999 = vmatprep.mubr.bf16.mxu0 %v732
        %1000 = vmatmul.mubr.bf16.gmra.mxu0 %v731
        %v1001 = vpop.f32.mrf.mxu0
        %v1002 = vadd.f32 %v800, %v1001
        %v1003 = vpop.f32.mrf.mxu0
        %v1004 = vadd.f32 %v804, %v1003
        %v1005 = vpop.f32.mrf.mxu0
        %v1006 = vadd.f32 %v800, %v1005
        %v1007 = vpop.f32.mrf.mxu0
        %v1008 = vadd.f32 %v804, %v1007
        %1009 = vmatprep.mubr.bf16.mxu0 %v734
        %1010 = vmatmul.mubr.bf16.gmra.mxu0 %v733
        %v1011 = vpop.f32.mrf.mxu0
        %v1012 = vadd.f32 %v800, %v1011
        %v1013 = vpop.f32.mrf.mxu0
        %v1014 = vadd.f32 %v804, %v1013
        %v1015 = vpop.f32.mrf.mxu0
        %v1016 = vadd.f32 %v800, %v1015
        %v1017 = vpop.f32.mrf.mxu0
        %v1018 = vadd.f32 %v804, %v1017
        %1019 = vmatprep.mubr.bf16.mxu0 %v736
        %1020 = vmatmul.mubr.bf16.gmra.mxu0 %v735
        %v1021 = vpop.f32.mrf.mxu0
        %v1022 = vadd.f32 %v800, %v1021
        %v1023 = vpop.f32.mrf.mxu0
        %v1024 = vadd.f32 %v804, %v1023
        %v1025 = vpop.f32.mrf.mxu0
        %v1026 = vadd.f32 %v800, %v1025
        %v1027 = vpop.f32.mrf.mxu0
        %v1028 = vadd.f32 %v804, %v1027
        %1029 = vmatprep.mubr.bf16.mxu0 %v738
        %1030 = vmatmul.mubr.bf16.gmra.mxu0 %v737
        %v1031 = vpop.f32.mrf.mxu0
        %v1032 = vadd.f32 %v800, %v1031
        %v1033 = vpop.f32.mrf.mxu0
        %v1034 = vadd.f32 %v804, %v1033
        %v1035 = vpop.f32.mrf.mxu0
        %v1036 = vadd.f32 %v800, %v1035
        %v1037 = vpop.f32.mrf.mxu0
        %v1038 = vadd.f32 %v804, %v1037
        %1039 = vmatprep.mubr.bf16.mxu0 %v740
        %1040 = vmatmul.mubr.bf16.gmra.mxu0 %v739
        %v1041 = vpop.f32.mrf.mxu0
        %v1042 = vadd.f32 %v800, %v1041
        %v1043 = vpop.f32.mrf.mxu0
        %v1044 = vadd.f32 %v804, %v1043
        %v1045 = vpop.f32.mrf.mxu0
        %v1046 = vadd.f32 %v800, %v1045
        %v1047 = vpop.f32.mrf.mxu0
        %v1048 = vadd.f32 %v804, %v1047
        %1049 = vmatprep.mubr.bf16.mxu0 %v742
        %1050 = vmatmul.mubr.bf16.gmra.mxu0 %v741
        %v1051 = vpop.f32.mrf.mxu0
        %v1052 = vadd.f32 %v800, %v1051
        %v1053 = vpop.f32.mrf.mxu0
        %v1054 = vadd.f32 %v804, %v1053
        %v1055 = vpop.f32.mrf.mxu0
        %v1056 = vadd.f32 %v800, %v1055
        %v1057 = vpop.f32.mrf.mxu0
        %v1058 = vadd.f32 %v804, %v1057
        %1059 = vmatprep.mubr.bf16.mxu0 %v744
        %1060 = vmatmul.mubr.bf16.gmra.mxu0 %v743
        %v1061 = vpop.f32.mrf.mxu0
        %v1062 = vadd.f32 %v800, %v1061
        %v1063 = vpop.f32.mrf.mxu0
        %v1064 = vadd.f32 %v804, %v1063
        %v1065 = vpop.f32.mrf.mxu0
        %v1066 = vadd.f32 %v800, %v1065
        %v1067 = vpop.f32.mrf.mxu0
        %v1068 = vadd.f32 %v804, %v1067
        %1069 = vmatprep.mubr.bf16.mxu0 %v746
        %1070 = vmatmul.mubr.bf16.gmra.mxu0 %v745
        %v1071 = vpop.f32.mrf.mxu0
        %v1072 = vadd.f32 %v800, %v1071
        %v1073 = vpop.f32.mrf.mxu0
        %v1074 = vadd.f32 %v804, %v1073
        %v1075 = vpop.f32.mrf.mxu0
        %v1076 = vadd.f32 %v800, %v1075
        %v1077 = vpop.f32.mrf.mxu0
        %v1078 = vadd.f32 %v804, %v1077
        %1079 = vmatprep.mubr.bf16.mxu0 %v748
        %1080 = vmatmul.mubr.bf16.gmra.mxu0 %v747
        %v1081 = vpop.f32.mrf.mxu0
        %v1082 = vadd.f32 %v800, %v1081
        %v1083 = vpop.f32.mrf.mxu0
        %v1084 = vadd.f32 %v804, %v1083
        %v1085 = vpop.f32.mrf.mxu0
        %v1086 = vadd.f32 %v800, %v1085
        %v1087 = vpop.f32.mrf.mxu0
        %v1088 = vadd.f32 %v804, %v1087
        %1089 = vmatprep.mubr.bf16.mxu0 %v750
        %1090 = vmatmul.mubr.bf16.gmra.mxu0 %v749
        %v1091 = vpop.f32.mrf.mxu0
        %v1092 = vadd.f32 %v800, %v1091
        %v1093 = vpop.f32.mrf.mxu0
        %v1094 = vadd.f32 %v804, %v1093
        %v1095 = vpop.f32.mrf.mxu0
        %v1096 = vadd.f32 %v800, %v1095
        %v1097 = vpop.f32.mrf.mxu0
        %v1098 = vadd.f32 %v804, %v1097
        %1099 = vmatprep.mubr.bf16.mxu0 %v752
        %1100 = vmatmul.mubr.bf16.gmra.mxu0 %v751
        %v1101 = vpop.f32.mrf.mxu0
        %v1102 = vadd.f32 %v800, %v1101
        %v1103 = vpop.f32.mrf.mxu0
        %v1104 = vadd.f32 %v804, %v1103
        %v1105 = vpop.f32.mrf.mxu0
        %v1106 = vadd.f32 %v800, %v1105
        %v1107 = vpop.f32.mrf.mxu0
        %v1108 = vadd.f32 %v804, %v1107
        %1109 = vmatprep.mubr.bf16.mxu0 %v754
        %1110 = vmatmul.mubr.bf16.gmra.mxu0 %v753
        %v1111 = vpop.f32.mrf.mxu0
        %v1112 = vadd.f32 %v800, %v1111
        %v1113 = vpop.f32.mrf.mxu0
        %v1114 = vadd.f32 %v804, %v1113
        %v1115 = vpop.f32.mrf.mxu0
        %v1116 = vadd.f32 %v800, %v1115
        %v1117 = vpop.f32.mrf.mxu0
        %v1118 = vadd.f32 %v804, %v1117
        %1119 = vmatprep.mubr.bf16.mxu0 %v756
        %1120 = vmatmul.mubr.bf16.gmra.mxu0 %v755
        %v1121 = vpop.f32.mrf.mxu0
        %v1122 = vadd.f32 %v800, %v1121
        %v1123 = vpop.f32.mrf.mxu0
        %v1124 = vadd.f32 %v804, %v1123
        %v1125 = vpop.f32.mrf.mxu0
        %v1126 = vadd.f32 %v800, %v1125
        %v1127 = vpop.f32.mrf.mxu0
        %v1128 = vadd.f32 %v804, %v1127
        %1129 = vmatprep.mubr.bf16.mxu0 %v758
        %1130 = vmatmul.mubr.bf16.gmra.mxu0 %v757
        %v1131 = vpop.f32.mrf.mxu0
        %v1132 = vadd.f32 %v800, %v1131
        %v1133 = vpop.f32.mrf.mxu0
        %v1134 = vadd.f32 %v804, %v1133
        %v1135 = vpop.f32.mrf.mxu0
        %v1136 = vadd.f32 %v800, %v1135
        %v1137 = vpop.f32.mrf.mxu0
        %v1138 = vadd.f32 %v804, %v1137
        %1139 = vmatprep.mubr.bf16.mxu0 %v760
        %1140 = vmatmul.mubr.bf16.gmra.mxu0 %v759
        %v1141 = vpop.f32.mrf.mxu0
        %v1142 = vadd.f32 %v800, %v1141
        %v1143 = vpop.f32.mrf.mxu0
        %v1144 = vadd.f32 %v804, %v1143
        %v1145 = vpop.f32.mrf.mxu0
        %v1146 = vadd.f32 %v800, %v1145
        %v1147 = vpop.f32.mrf.mxu0
        %v1148 = vadd.f32 %v804, %v1147
        %1149 = vmatprep.mubr.bf16.mxu0 %v762
        %1150 = vmatmul.mubr.bf16.gmra.mxu0 %v761
        %v1151 = vpop.f32.mrf.mxu0
        %v1152 = vadd.f32 %v800, %v1151
        %v1153 = vpop.f32.mrf.mxu0
        %v1154 = vadd.f32 %v804, %v1153
        %v1155 = vpop.f32.mrf.mxu0
        %v1156 = vadd.f32 %v800, %v1155
        %v1157 = vpop.f32.mrf.mxu0
        %v1158 = vadd.f32 %v804, %v1157
        %1159 = vdwg.mxu0
        %v1160 = vmax.f32 %v1002, 0.0
        %v1161 = vmax.f32 %v1004, 0.0
        %v1162 = vmax.f32 %v1006, 0.0
        %v1163 = vmax.f32 %v1008, 0.0
        %v1164 = vmax.f32 %v1012, 0.0
        %v1165 = vmax.f32 %v1014, 0.0
        %v1166 = vmax.f32 %v1016, 0.0
        %v1167 = vmax.f32 %v1018, 0.0
        %v1168 = vmax.f32 %v1022, 0.0
        %v1169 = vmax.f32 %v1024, 0.0
        %v1170 = vmax.f32 %v1026, 0.0
        %v1171 = vmax.f32 %v1028, 0.0
        %v1172 = vmax.f32 %v1032, 0.0
        %v1173 = vmax.f32 %v1034, 0.0
        %v1174 = vmax.f32 %v1036, 0.0
        %v1175 = vmax.f32 %v1038, 0.0
        %v1176 = vmax.f32 %v1042, 0.0
        %v1177 = vmax.f32 %v1044, 0.0
        %v1178 = vmax.f32 %v1046, 0.0
        %v1179 = vmax.f32 %v1048, 0.0
        %v1180 = vmax.f32 %v1052, 0.0
        %v1181 = vmax.f32 %v1054, 0.0
        %v1182 = vmax.f32 %v1056, 0.0
        %v1183 = vmax.f32 %v1058, 0.0
        %v1184 = vmax.f32 %v1062, 0.0
        %v1185 = vmax.f32 %v1064, 0.0
        %v1186 = vmax.f32 %v1066, 0.0
        %v1187 = vmax.f32 %v1068, 0.0
        %v1188 = vmax.f32 %v1072, 0.0
        %v1189 = vmax.f32 %v1074, 0.0
        %v1190 = vmax.f32 %v1076, 0.0
        %v1191 = vmax.f32 %v1078, 0.0
        %v1192 = vmax.f32 %v1082, 0.0
        %v1193 = vmax.f32 %v1084, 0.0
        %v1194 = vmax.f32 %v1086, 0.0
        %v1195 = vmax.f32 %v1088, 0.0
        %v1196 = vmax.f32 %v1092, 0.0
        %v1197 = vmax.f32 %v1094, 0.0
        %v1198 = vmax.f32 %v1096, 0.0
        %v1199 = vmax.f32 %v1098, 0.0
        %v1200 = vmax.f32 %v1102, 0.0
        %v1201 = vmax.f32 %v1104, 0.0
        %v1202 = vmax.f32 %v1106, 0.0
        %v1203 = vmax.f32 %v1108, 0.0
        %v1204 = vmax.f32 %v1112, 0.0
        %v1205 = vmax.f32 %v1114, 0.0
        %v1206 = vmax.f32 %v1116, 0.0
        %v1207 = vmax.f32 %v1118, 0.0
        %v1208 = vmax.f32 %v1122, 0.0
        %v1209 = vmax.f32 %v1124, 0.0
        %v1210 = vmax.f32 %v1126, 0.0
        %v1211 = vmax.f32 %v1128, 0.0
        %v1212 = vmax.f32 %v1132, 0.0
        %v1213 = vmax.f32 %v1134, 0.0
        %v1214 = vmax.f32 %v1136, 0.0
        %v1215 = vmax.f32 %v1138, 0.0
        %v1216 = vmax.f32 %v1142, 0.0
        %v1217 = vmax.f32 %v1144, 0.0
        %v1218 = vmax.f32 %v1146, 0.0
        %v1219 = vmax.f32 %v1148, 0.0
        %v1220 = vmax.f32 %v1152, 0.0
        %v1221 = vmax.f32 %v1154, 0.0
        %v1222 = vmax.f32 %v1156, 0.0
        %v1223 = vmax.f32 %v1158, 0.0
        %v1224 = vpack.c.bf16 %v1162, %v1160
        %v1225 = vpack.c.bf16 %v1163, %v1161
        %v1226 = vpack.c.bf16 %v1166, %v1164
        %v1227 = vpack.c.bf16 %v1167, %v1165
        %v1228 = vpack.c.bf16 %v1170, %v1168
        %v1229 = vpack.c.bf16 %v1171, %v1169
        %v1230 = vpack.c.bf16 %v1174, %v1172
        %v1231 = vpack.c.bf16 %v1175, %v1173
        %v1232 = vpack.c.bf16 %v1178, %v1176
        %v1233 = vpack.c.bf16 %v1179, %v1177
        %v1234 = vpack.c.bf16 %v1182, %v1180
        %v1235 = vpack.c.bf16 %v1183, %v1181
        %v1236 = vpack.c.bf16 %v1186, %v1184
        %v1237 = vpack.c.bf16 %v1187, %v1185
        %v1238 = vpack.c.bf16 %v1190, %v1188
        %v1239 = vpack.c.bf16 %v1191, %v1189
        %v1240 = vpack.c.bf16 %v1194, %v1192
        %v1241 = vpack.c.bf16 %v1195, %v1193
        %v1242 = vpack.c.bf16 %v1198, %v1196
        %v1243 = vpack.c.bf16 %v1199, %v1197
        %v1244 = vpack.c.bf16 %v1202, %v1200
        %v1245 = vpack.c.bf16 %v1203, %v1201
        %v1246 = vpack.c.bf16 %v1206, %v1204
        %v1247 = vpack.c.bf16 %v1207, %v1205
        %v1248 = vpack.c.bf16 %v1210, %v1208
        %v1249 = vpack.c.bf16 %v1211, %v1209
        %v1250 = vpack.c.bf16 %v1214, %v1212
        %v1251 = vpack.c.bf16 %v1215, %v1213
        %v1252 = vpack.c.bf16 %v1218, %v1216
        %v1253 = vpack.c.bf16 %v1219, %v1217
        %v1254 = vpack.c.bf16 %v1222, %v1220
        %v1255 = vpack.c.bf16 %v1223, %v1221
        %v1256 = vld [vmem:[%s5] sm:$0xf]
        %v1257 = vld [vmem:[%s5 + $0x4] sm:$0xf]
        %v1258 = vld [vmem:[%s5 + $0x8] sm:$0xf]
        %v1259 = vld [vmem:[%s5 + $0xc] sm:$0xf]
        %v1260 = vld [vmem:[%s5 + $0x10] sm:$0xf]
        %v1261 = vld [vmem:[%s5 + $0x14] sm:$0xf]
        %v1262 = vld [vmem:[%s5 + $0x18] sm:$0xf]
        %v1263 = vld [vmem:[%s5 + $0x1c] sm:$0xf]
        %v1264 = vld [vmem:[%s5 + $0x20] sm:$0xf]
        %v1265 = vld [vmem:[%s5 + $0x24] sm:$0xf]
        %v1266 = vld [vmem:[%s5 + $0x28] sm:$0xf]
        %v1267 = vld [vmem:[%s5 + $0x2c] sm:$0xf]
        %v1268 = vld [vmem:[%s5 + $0x30] sm:$0xf]
        %v1269 = vld [vmem:[%s5 + $0x34] sm:$0xf]
        %v1270 = vld [vmem:[%s5 + $0x38] sm:$0xf]
        %v1271 = vld [vmem:[%s5 + $0x3c] sm:$0xf]
        %v1272 = vld [vmem:[%s5 + $0x40] sm:$0xf]
        %v1273 = vld [vmem:[%s5 + $0x44] sm:$0xf]
        %v1274 = vld [vmem:[%s5 + $0x48] sm:$0xf]
        %v1275 = vld [vmem:[%s5 + $0x4c] sm:$0xf]
        %v1276 = vld [vmem:[%s5 + $0x50] sm:$0xf]
        %v1277 = vld [vmem:[%s5 + $0x54] sm:$0xf]
        %v1278 = vld [vmem:[%s5 + $0x58] sm:$0xf]
        %v1279 = vld [vmem:[%s5 + $0x5c] sm:$0xf]
        %v1280 = vld [vmem:[%s5 + $0x60] sm:$0xf]
        %v1281 = vld [vmem:[%s5 + $0x64] sm:$0xf]
        %v1282 = vld [vmem:[%s5 + $0x68] sm:$0xf]
        %v1283 = vld [vmem:[%s5 + $0x6c] sm:$0xf]
        %v1284 = vld [vmem:[%s5 + $0x70] sm:$0xf]
        %v1285 = vld [vmem:[%s5 + $0x74] sm:$0xf]
        %v1286 = vld [vmem:[%s5 + $0x78] sm:$0xf]
        %v1287 = vld [vmem:[%s5 + $0x7c] sm:$0xf]
        %s1288 = sld [smem:[#allocation2]]
        %v1289 = vstv %s1288
        %v1322 = vunpack.c.l.b16 %v1256
        %v1323 = vunpack.c.l.b16 %v1257
        %v1324 = vunpack.c.l.b16 %v1258
        %v1325 = vunpack.c.l.b16 %v1259
        %v1326 = vunpack.c.l.b16 %v1260
        %v1327 = vunpack.c.l.b16 %v1261
        %v1328 = vunpack.c.l.b16 %v1262
        %v1329 = vunpack.c.l.b16 %v1263
        %v1330 = vunpack.c.l.b16 %v1264
        %v1331 = vunpack.c.l.b16 %v1265
        %v1332 = vunpack.c.l.b16 %v1266
        %v1333 = vunpack.c.l.b16 %v1267
        %v1334 = vunpack.c.l.b16 %v1268
        %v1335 = vunpack.c.l.b16 %v1269
        %v1336 = vunpack.c.l.b16 %v1270
        %v1337 = vunpack.c.l.b16 %v1271
        %v1338 = vunpack.c.l.b16 %v1272
        %v1339 = vunpack.c.l.b16 %v1273
        %v1340 = vunpack.c.l.b16 %v1274
        %v1341 = vunpack.c.l.b16 %v1275
        %v1342 = vunpack.c.l.b16 %v1276
        %v1343 = vunpack.c.l.b16 %v1277
        %v1344 = vunpack.c.l.b16 %v1278
        %v1345 = vunpack.c.l.b16 %v1279
        %v1346 = vunpack.c.l.b16 %v1280
        %v1347 = vunpack.c.l.b16 %v1281
        %v1348 = vunpack.c.l.b16 %v1282
        %v1349 = vunpack.c.l.b16 %v1283
        %v1350 = vunpack.c.l.b16 %v1284
        %v1351 = vunpack.c.l.b16 %v1285
        %v1352 = vunpack.c.l.b16 %v1286
        %v1353 = vunpack.c.l.b16 %v1287
        %v1354 = vpack.c.b16 %v1323, %v1322
        %v1355 = vpack.c.b16 %v1325, %v1324
        %v1356 = vpack.c.b16 %v1327, %v1326
        %v1357 = vpack.c.b16 %v1329, %v1328
        %v1358 = vpack.c.b16 %v1331, %v1330
        %v1359 = vpack.c.b16 %v1333, %v1332
        %v1360 = vpack.c.b16 %v1335, %v1334
        %v1361 = vpack.c.b16 %v1337, %v1336
        %v1362 = vpack.c.b16 %v1339, %v1338
        %v1363 = vpack.c.b16 %v1341, %v1340
        %v1364 = vpack.c.b16 %v1343, %v1342
        %v1365 = vpack.c.b16 %v1345, %v1344
        %v1366 = vpack.c.b16 %v1347, %v1346
        %v1367 = vpack.c.b16 %v1349, %v1348
        %v1368 = vpack.c.b16 %v1351, %v1350
        %v1369 = vpack.c.b16 %v1353, %v1352
        %1386 = vmatprep.subr.bf16.mxu0 0
        %1387 = vmatpush1.bf16.msra.mxu0 %v1361
        %1388 = vmatprep.subr.bf16.mxu0 0
        %1389 = vmatpush1.bf16.msra.mxu0 %v1360
        %1390 = vmatprep.subr.bf16.mxu0 0
        %1391 = vmatpush1.bf16.msra.mxu0 %v1359
        %1392 = vmatprep.subr.bf16.mxu0 0
        %1393 = vmatpush1.bf16.msra.mxu0 %v1358
        %1394 = vmatprep.subr.bf16.mxu0 0
        %1395 = vmatpush1.bf16.msra.mxu0 %v1357
        %1396 = vmatprep.subr.bf16.mxu0 0
        %1397 = vmatpush1.bf16.msra.mxu0 %v1356
        %1398 = vmatprep.subr.bf16.mxu0 0
        %1399 = vmatpush1.bf16.msra.mxu0 %v1355
        %1400 = vmatprep.subr.bf16.mxu0 0
        %1401 = vmatpush1.bf16.msra.mxu0 %v1354
        %1402 = vmatprep.subr.bf16.mxu0 0
        %1403 = vmatpush2.bf16.msra.mxu0 %v1369
        %1404 = vmatprep.subr.bf16.mxu0 0
        %1405 = vmatpush2.bf16.msra.mxu0 %v1368
        %1406 = vmatprep.subr.bf16.mxu0 0
        %1407 = vmatpush2.bf16.msra.mxu0 %v1367
        %1408 = vmatprep.subr.bf16.mxu0 0
        %1409 = vmatpush2.bf16.msra.mxu0 %v1366
        %1410 = vmatprep.subr.bf16.mxu0 0
        %1411 = vmatpush2.bf16.msra.mxu0 %v1365
        %1412 = vmatprep.subr.bf16.mxu0 0
        %1413 = vmatpush2.bf16.msra.mxu0 %v1364
        %1414 = vmatprep.subr.bf16.mxu0 0
        %1415 = vmatpush2.bf16.msra.mxu0 %v1363
        %1416 = vmatprep.subr.bf16.mxu0 0
        %1417 = vmatpush2.bf16.msra.mxu0 %v1362
        %1418 = vmatprep.mubr.bf16.mxu0 %v1225
        %1419 = vmatmul.mubr.bf16.gmra.mxu0 %v1224
        %v1420 = vpop.f32.mrf.mxu0
        %v1421 = vadd.f32 %v1289, %v1420
        %v1422 = vpop.f32.mrf.mxu0
        %v1423 = vpop.f32.mrf.mxu0
        %v1424 = vadd.f32 %v1289, %v1423
        %v1425 = vpop.f32.mrf.mxu0
        %1426 = vmatprep.mubr.bf16.mxu0 %v1227
        %1427 = vmatmul.mubr.bf16.gmra.mxu0 %v1226
        %v1428 = vpop.f32.mrf.mxu0
        %v1429 = vadd.f32 %v1289, %v1428
        %v1430 = vpop.f32.mrf.mxu0
        %v1431 = vpop.f32.mrf.mxu0
        %v1432 = vadd.f32 %v1289, %v1431
        %v1433 = vpop.f32.mrf.mxu0
        %1434 = vmatprep.mubr.bf16.mxu0 %v1229
        %1435 = vmatmul.mubr.bf16.gmra.mxu0 %v1228
        %v1436 = vpop.f32.mrf.mxu0
        %v1437 = vadd.f32 %v1289, %v1436
        %v1438 = vpop.f32.mrf.mxu0
        %v1439 = vpop.f32.mrf.mxu0
        %v1440 = vadd.f32 %v1289, %v1439
        %v1441 = vpop.f32.mrf.mxu0
        %1442 = vmatprep.mubr.bf16.mxu0 %v1231
        %1443 = vmatmul.mubr.bf16.gmra.mxu0 %v1230
        %v1444 = vpop.f32.mrf.mxu0
        %v1445 = vadd.f32 %v1289, %v1444
        %v1446 = vpop.f32.mrf.mxu0
        %v1447 = vpop.f32.mrf.mxu0
        %v1448 = vadd.f32 %v1289, %v1447
        %v1449 = vpop.f32.mrf.mxu0
        %1450 = vmatprep.mubr.bf16.mxu0 %v1233
        %1451 = vmatmul.mubr.bf16.gmra.mxu0 %v1232
        %v1452 = vpop.f32.mrf.mxu0
        %v1453 = vadd.f32 %v1289, %v1452
        %v1454 = vpop.f32.mrf.mxu0
        %v1455 = vpop.f32.mrf.mxu0
        %v1456 = vadd.f32 %v1289, %v1455
        %v1457 = vpop.f32.mrf.mxu0
        %1458 = vmatprep.mubr.bf16.mxu0 %v1235
        %1459 = vmatmul.mubr.bf16.gmra.mxu0 %v1234
        %v1460 = vpop.f32.mrf.mxu0
        %v1461 = vadd.f32 %v1289, %v1460
        %v1462 = vpop.f32.mrf.mxu0
        %v1463 = vpop.f32.mrf.mxu0
        %v1464 = vadd.f32 %v1289, %v1463
        %v1465 = vpop.f32.mrf.mxu0
        %1466 = vmatprep.mubr.bf16.mxu0 %v1237
        %1467 = vmatmul.mubr.bf16.gmra.mxu0 %v1236
        %v1468 = vpop.f32.mrf.mxu0
        %v1469 = vadd.f32 %v1289, %v1468
        %v1470 = vpop.f32.mrf.mxu0
        %v1471 = vpop.f32.mrf.mxu0
        %v1472 = vadd.f32 %v1289, %v1471
        %v1473 = vpop.f32.mrf.mxu0
        %1474 = vmatprep.mubr.bf16.mxu0 %v1239
        %1475 = vmatmul.mubr.bf16.gmra.mxu0 %v1238
        %v1476 = vpop.f32.mrf.mxu0
        %v1477 = vadd.f32 %v1289, %v1476
        %v1478 = vpop.f32.mrf.mxu0
        %v1479 = vpop.f32.mrf.mxu0
        %v1480 = vadd.f32 %v1289, %v1479
        %v1481 = vpop.f32.mrf.mxu0
        %1482 = vmatprep.mubr.bf16.mxu0 %v1241
        %1483 = vmatmul.mubr.bf16.gmra.mxu0 %v1240
        %v1484 = vpop.f32.mrf.mxu0
        %v1485 = vadd.f32 %v1289, %v1484
        %v1486 = vpop.f32.mrf.mxu0
        %v1487 = vpop.f32.mrf.mxu0
        %v1488 = vadd.f32 %v1289, %v1487
        %v1489 = vpop.f32.mrf.mxu0
        %1490 = vmatprep.mubr.bf16.mxu0 %v1243
        %1491 = vmatmul.mubr.bf16.gmra.mxu0 %v1242
        %v1492 = vpop.f32.mrf.mxu0
        %v1493 = vadd.f32 %v1289, %v1492
        %v1494 = vpop.f32.mrf.mxu0
        %v1495 = vpop.f32.mrf.mxu0
        %v1496 = vadd.f32 %v1289, %v1495
        %v1497 = vpop.f32.mrf.mxu0
        %1498 = vmatprep.mubr.bf16.mxu0 %v1245
        %1499 = vmatmul.mubr.bf16.gmra.mxu0 %v1244
        %v1500 = vpop.f32.mrf.mxu0
        %v1501 = vadd.f32 %v1289, %v1500
        %v1502 = vpop.f32.mrf.mxu0
        %v1503 = vpop.f32.mrf.mxu0
        %v1504 = vadd.f32 %v1289, %v1503
        %v1505 = vpop.f32.mrf.mxu0
        %1506 = vmatprep.mubr.bf16.mxu0 %v1247
        %1507 = vmatmul.mubr.bf16.gmra.mxu0 %v1246
        %v1508 = vpop.f32.mrf.mxu0
        %v1509 = vadd.f32 %v1289, %v1508
        %v1510 = vpop.f32.mrf.mxu0
        %v1511 = vpop.f32.mrf.mxu0
        %v1512 = vadd.f32 %v1289, %v1511
        %v1513 = vpop.f32.mrf.mxu0
        %1514 = vmatprep.mubr.bf16.mxu0 %v1249
        %1515 = vmatmul.mubr.bf16.gmra.mxu0 %v1248
        %v1516 = vpop.f32.mrf.mxu0
        %v1517 = vadd.f32 %v1289, %v1516
        %v1518 = vpop.f32.mrf.mxu0
        %v1519 = vpop.f32.mrf.mxu0
        %v1520 = vadd.f32 %v1289, %v1519
        %v1521 = vpop.f32.mrf.mxu0
        %1522 = vmatprep.mubr.bf16.mxu0 %v1251
        %1523 = vmatmul.mubr.bf16.gmra.mxu0 %v1250
        %v1524 = vpop.f32.mrf.mxu0
        %v1525 = vadd.f32 %v1289, %v1524
        %v1526 = vpop.f32.mrf.mxu0
        %v1527 = vpop.f32.mrf.mxu0
        %v1528 = vadd.f32 %v1289, %v1527
        %v1529 = vpop.f32.mrf.mxu0
        %1530 = vmatprep.mubr.bf16.mxu0 %v1253
        %1531 = vmatmul.mubr.bf16.gmra.mxu0 %v1252
        %v1532 = vpop.f32.mrf.mxu0
        %v1533 = vadd.f32 %v1289, %v1532
        %v1534 = vpop.f32.mrf.mxu0
        %v1535 = vpop.f32.mrf.mxu0
        %v1536 = vadd.f32 %v1289, %v1535
        %v1537 = vpop.f32.mrf.mxu0
        %1538 = vmatprep.mubr.bf16.mxu0 %v1255
        %1539 = vmatmul.mubr.bf16.gmra.mxu0 %v1254
        %v1540 = vpop.f32.mrf.mxu0
        %v1541 = vadd.f32 %v1289, %v1540
        %v1542 = vpop.f32.mrf.mxu0
        %v1543 = vpop.f32.mrf.mxu0
        %v1544 = vadd.f32 %v1289, %v1543
        %v1545 = vpop.f32.mrf.mxu0
        %1546 = vdwg.mxu0
        %vm1547 = vcmask 7168
        %1548 = vst.msk [vmem:[%s315] sm:$0xff] %vm1547, %v1421
        %1549 = vst.msk [vmem:[%s315 + $0x8] sm:$0xff] %vm1547, %v1424
        %1550 = vst.msk [vmem:[%s315 + $0x10] sm:$0xff] %vm1547, %v1429
        %1551 = vst.msk [vmem:[%s315 + $0x18] sm:$0xff] %vm1547, %v1432
        %1552 = vst.msk [vmem:[%s315 + $0x20] sm:$0xff] %vm1547, %v1437
        %1553 = vst.msk [vmem:[%s315 + $0x28] sm:$0xff] %vm1547, %v1440
        %1554 = vst.msk [vmem:[%s315 + $0x30] sm:$0xff] %vm1547, %v1445
        %1555 = vst.msk [vmem:[%s315 + $0x38] sm:$0xff] %vm1547, %v1448
        %1556 = vst.msk [vmem:[%s315 + $0x40] sm:$0xff] %vm1547, %v1453
        %1557 = vst.msk [vmem:[%s315 + $0x48] sm:$0xff] %vm1547, %v1456
        %1558 = vst.msk [vmem:[%s315 + $0x50] sm:$0xff] %vm1547, %v1461
        %1559 = vst.msk [vmem:[%s315 + $0x58] sm:$0xff] %vm1547, %v1464
        %1560 = vst.msk [vmem:[%s315 + $0x60] sm:$0xff] %vm1547, %v1469
        %1561 = vst.msk [vmem:[%s315 + $0x68] sm:$0xff] %vm1547, %v1472
        %1562 = vst.msk [vmem:[%s315 + $0x70] sm:$0xff] %vm1547, %v1477
        %1563 = vst.msk [vmem:[%s315 + $0x78] sm:$0xff] %vm1547, %v1480
        %1564 = vst.msk [vmem:[%s315 + $0x80] sm:$0xff] %vm1547, %v1485
        %1565 = vst.msk [vmem:[%s315 + $0x88] sm:$0xff] %vm1547, %v1488
        %1566 = vst.msk [vmem:[%s315 + $0x90] sm:$0xff] %vm1547, %v1493
        %1567 = vst.msk [vmem:[%s315 + $0x98] sm:$0xff] %vm1547, %v1496
        %1568 = vst.msk [vmem:[%s315 + $0xa0] sm:$0xff] %vm1547, %v1501
        %1569 = vst.msk [vmem:[%s315 + $0xa8] sm:$0xff] %vm1547, %v1504
        %1570 = vst.msk [vmem:[%s315 + $0xb0] sm:$0xff] %vm1547, %v1509
        %1571 = vst.msk [vmem:[%s315 + $0xb8] sm:$0xff] %vm1547, %v1512
        %1572 = vst.msk [vmem:[%s315 + $0xc0] sm:$0xff] %vm1547, %v1517
        %1573 = vst.msk [vmem:[%s315 + $0xc8] sm:$0xff] %vm1547, %v1520
        %1574 = vst.msk [vmem:[%s315 + $0xd0] sm:$0xff] %vm1547, %v1525
        %1575 = vst.msk [vmem:[%s315 + $0xd8] sm:$0xff] %vm1547, %v1528
        %1576 = vst.msk [vmem:[%s315 + $0xe0] sm:$0xff] %vm1547, %v1533
        %1577 = vst.msk [vmem:[%s315 + $0xe8] sm:$0xff] %vm1547, %v1536
        %1578 = vst.msk [vmem:[%s315 + $0xf0] sm:$0xff] %vm1547, %v1541
        %1579 = vst.msk [vmem:[%s315 + $0xf8] sm:$0xff] %vm1547, %v1544
        %s1580 = smul.u32 32, %s23
        %p1581 = scmp.lt.s32.totalorder %s1580, 127
        %s1582 = scalar_select %p1581, %s1580, 127
        %s1583 = smul.addr %s1582, 8
        %s1584 = scalar_lea.vmem %s7, %s1583
        // Predicated region
        $region57: #{tpu_custom_call.1} parent=47 // pred_check
          %p1585 = pneg %p193
        $region58: #{tpu_custom_call.1} parent=47 // pred_check_branch
          %1587 = sbr.rel (%p1585) target = $region60
        $region59: #{tpu_custom_call.1} parent=47 // pred_region
          %s1588 = smul.u32 32, %s23
        $region60: #{tpu_custom_call.1} parent=47 // pred_fallthru
          _
      $region48: #{tpu_custom_call.1} parent=5 // pred_fallthru
        _
      %p1589 = scmp.le.s32.totalorder 2, %s18
      // Predicated region
      $region61: #{tpu_custom_call.1} parent=5 // pred_check
        %p1590 = pneg %p1589
      $region62: #{tpu_custom_call.1} parent=5 // pred_check_branch
        %1592 = sbr.rel (%p1590) target = $region64
      $region63: #{tpu_custom_call.1} parent=5 // pred_region
        %s1593 = ssub.s32 %s18, 2
        // Predicated region
        $region65: #{tpu_custom_call.1} parent=63 // pred_check
          %p1594 = pneg %p199
        $region66: #{tpu_custom_call.1} parent=63 // pred_check_branch
          %1596 = sbr.rel (%p1594) target = $region68
        $region67: #{tpu_custom_call.1} parent=63 // pred_region
          %s1597 = smul.u32 32, %s24
          %p1598 = scmp.lt.s32.totalorder %s1597, 127
          %s1599 = scalar_select %p1598, %s1597, 127
          %s1600 = smul.addr %s1599, 8
          %s1601 = scalar_lea.vmem %s7, %s1600
        $region68: #{tpu_custom_call.1} parent=63 // pred_fallthru
          _
      $region64: #{tpu_custom_call.1} parent=5 // pred_fallthru
        _
    $region6: #{tpu_custom_call.1} parent=1 // loop_footer
      %s22 = sadd.s32 1, %s18
    $region7: #{tpu_custom_call.1} parent=1 // loop_footer_branch
      %17 = sbr.rel target = $region3
    $region8: #{tpu_custom_call.1} parent=1 // loop_exit
      _
    %1602 = vsyncpa [#allocation4], 1
    %s1603 = scalar_lea.sflag [#allocation4], 1
    %1604 = vsyncpa %s1603, 1
    %1605 = vsyncpa [#allocation6], 1

</llo_original>
